<compile_context>
chip_gen: v6e
topology: v6e:2x2x1
jax: 0.10.0
libtpu: 0.0.40
codegen_flags: <defaults>
</compile_context>

<pallas_src>
import numpy as np
import jax
import jax.numpy as jnp
from jax.experimental import pallas as pl
from jax.experimental.pallas import tpu as pltpu


_PAD_L = 8  # sublane-aligned left padding (>= K//2) used for 'same' padding along H


def _make_fused_kernel(K, act):
    """Fused con2D(7x7) -> con2D2(7x7) -> join_conv(1x1), all 'same', + activation."""
    half = K // 2

    def kernel(x_ref, m1_ref, b1_ref, m2_ref, b2_ref, m3_ref, b3_ref,
               o_ref, xpad_ref, ypad_ref):
        # x_ref  : (1, H, W*Cin)          one image, rows as lane-dense (w, c) slabs
        # m1/m2  : (K, W*Cin_l, W*Cout_l) per-kh band matrices (kw taps, channels and
        #                                 the 'same' W padding folded into the bands)
        # m3_ref : (W*C, W*Cout)          block-diagonal 1x1-conv matrix
        # b*_ref : (1, W*Cout_l)          channel bias tiled along W
        # o_ref  : (1, H, W*Cout)
        # xpad_ref / ypad_ref: H-padded VMEM scratch for conv1 / conv2 inputs
        H = x_ref.shape[1]

        def conv7(pad_ref, src, m_ref, b_ref):
            # 'same' padding along H: zero the scratch, drop the image in at a
            # sublane-aligned offset, then accumulate K banded MXU matmuls.
            pad_ref[...] = jnp.zeros_like(pad_ref)
            pad_ref[pl.ds(_PAD_L, H), :] = src
            acc = jnp.zeros((H, m_ref.shape[2]), jnp.float32)
            for kh in range(K):                         # unrolled (K == 7)
                rows = pad_ref[pl.ds(_PAD_L - half + kh, H), :]
                acc = acc + jnp.dot(rows, m_ref[kh],
                                    preferred_element_type=jnp.float32)
            return act(acc + b_ref[...])

        y1 = conv7(xpad_ref, x_ref[0].astype(jnp.float32), m1_ref, b1_ref)  # con2D
        y2 = conv7(ypad_ref, y1, m2_ref, b2_ref)                            # con2D2
        y3 = act(jnp.dot(y2, m3_ref[...],                                   # join_conv
                         preferred_element_type=jnp.float32) + b3_ref[...])
        o_ref[0] = y3.astype(o_ref.dtype)

    return kernel


def tf2tf_fused(x_rows, m1, b1t, m2, b2t, m3, b3t, activation=None, kernel_size=7):
    """x_rows: (B, H, W*Cin) row-slab layout.  Returns (B, H, W*Cout)."""
    B, H, WCin = x_rows.shape
    WC1 = m1.shape[2]          # W * kernels
    WC3 = m3.shape[1]          # W * output_channels
    act = activation if activation is not None else (lambda v: v)

    # padded-row scratch: rows [_PAD_L - K//2, _PAD_L + K//2 + H) are addressed
    hp = _PAD_L + H + kernel_size // 2
    hp = ((hp + 7) // 8) * 8

    return pl.pallas_call(
        _make_fused_kernel(kernel_size, act),
        out_shape=jax.ShapeDtypeStruct((B, H, WC3), x_rows.dtype),
        grid=(B,),
        in_specs=[
            pl.BlockSpec((1, H, WCin), lambda i: (i, 0, 0)),
            pl.BlockSpec(m1.shape, lambda i: (0, 0, 0)),
            pl.BlockSpec(b1t.shape, lambda i: (0, 0)),
            pl.BlockSpec(m2.shape, lambda i: (0, 0, 0)),
            pl.BlockSpec(b2t.shape, lambda i: (0, 0)),
            pl.BlockSpec(m3.shape, lambda i: (0, 0)),
            pl.BlockSpec(b3t.shape, lambda i: (0, 0)),
        ],
        out_specs=pl.BlockSpec((1, H, WC3), lambda i: (i, 0, 0)),
        scratch_shapes=[
            pltpu.VMEM((hp, WCin), jnp.float32),
            pltpu.VMEM((hp, WC1), jnp.float32),
        ],
        compiler_params=pltpu.CompilerParams(dimension_semantics=("parallel",)),
    )(x_rows, m1, b1t, m2, b2t, m3, b3t)


def _band_weights(w_hwio, W):
    """(K, K, Cin, Cout) HWIO taps -> (K, W*Cin, W*Cout) band matrices.

    For each kh, M[kh] maps a full input row (lane layout w*Cin + ci) to a full
    output row (lane layout w*Cout + co); the kw taps and the 'same' zero padding
    along W are encoded in the band structure (out-of-range taps simply absent).
    Host-side, init-time only.
    """
    w = np.asarray(jax.device_get(w_hwio), dtype=np.float32)
    K, K2, Cin, Cout = w.shape
    assert K == K2
    half = K // 2
    M = np.zeros((K, W * Cin, W * Cout), np.float32)
    for kh in range(K):
        for w_out in range(W):
            for kw in range(K):
                w_in = w_out + kw - half
                if 0 <= w_in < W:
                    M[kh, w_in * Cin:(w_in + 1) * Cin,
                      w_out * Cout:(w_out + 1) * Cout] = w[kh, kw]
    return jnp.asarray(M)


class TimeFreq2TimeFreqSimplePallas:
    """JAX/Pallas port of TimeFreq2TimeFreqSimple (deterministic synthetic init)."""

    def __init__(self, in_channels, kernels, output_channels,
                 activation_function=None, key=None):
        # NOTE: activation_function must be a JAX-traceable elementwise fn
        # (default identity); it is fused into the kernel.
        self.activation_function = (activation_function
                                    if activation_function is not None
                                    else (lambda x: x))
        self.in_channels = in_channels
        self.kernels = kernels
        self.output_channels = output_channels
        if key is None:
            key = jax.random.PRNGKey(42)
        k1, k2, k3, k4, k5, k6 = jax.random.split(key, 6)

        def init_conv(kw_key, kb_key, K, cin, cout):
            # PyTorch Conv2d default init: U(-1/sqrt(fan_in), 1/sqrt(fan_in))
            fan_in = cin * K * K
            bound = 1.0 / float(np.sqrt(fan_in))
            w = jax.random.uniform(kw_key, (K, K, cin, cout), jnp.float32,
                                   -bound, bound)
            b = jax.random.uniform(kb_key, (cout,), jnp.float32, -bound, bound)
            return w, b

        self.w1, self.b1 = init_conv(k1, k2, 7, in_channels, kernels)
        self.w2, self.b2 = init_conv(k3, k4, 7, kernels, kernels)
        self.w3, self.b3 = init_conv(k5, k6, 1, kernels, output_channels)
        self._prep_cache = {}

    def _prepared(self, W):
        if W not in self._prep_cache:
            m1 = _band_weights(self.w1, W)
            m2 = _band_weights(self.w2, W)
            # 1x1 conv == block-diagonal matrix in the (w, c) row layout.
            w3_2d = np.asarray(jax.device_get(self.w3[0, 0]), dtype=np.float32)
            m3 = jnp.asarray(np.kron(np.eye(W, dtype=np.float32), w3_2d))
            b1t = jnp.tile(self.b1, W).reshape(1, -1)
            b2t = jnp.tile(self.b2, W).reshape(1, -1)
            b3t = jnp.tile(self.b3, W).reshape(1, -1)
            self._prep_cache[W] = (m1, b1t, m2, b2t, m3, b3t)
        return self._prep_cache[W]

    def __call__(self, x_nchw):
        B, Cin, H, W = x_nchw.shape
        m1, b1t, m2, b2t, m3, b3t = self._prepared(W)
        # NCHW -> lane-dense row slabs (B, H, W*Cin)    (layout glue only)
        x_rows = jnp.transpose(x_nchw, (0, 2, 3, 1)).reshape(B, H, W * Cin)
        y = tf2tf_fused(x_rows, m1, b1t, m2, b2t, m3, b3t,
                        activation=self.activation_function, kernel_size=7)
        # (B, H, W*Cout) -> NCHW
        return jnp.transpose(y.reshape(B, H, W, self.output_channels),
                             (0, 3, 1, 2))


def _conv_ref_nhwc(x, w, b):
    y = jax.lax.conv_general_dilated(
        x, w, window_strides=(1, 1), padding="SAME",
        dimension_numbers=("NHWC", "HWIO", "NHWC"))
    return y + b


if __name__ == "__main__":
    B, Cin, H, W = 2, 4, 16, 16
    kernels, Cout = 8, 4

    x = jax.random.normal(jax.random.PRNGKey(0), (B, Cin, H, W), jnp.float32)

    model = TimeFreq2TimeFreqSimplePallas(in_channels=Cin, kernels=kernels,
                                          output_channels=Cout)
    out = jax.block_until_ready(model(x))
    assert out.shape == (B, Cout, H, W), out.shape

    # Pure-JAX reference for the same weights (identity activation).
    x_nhwc = jnp.transpose(x, (0, 2, 3, 1))
    t = _conv_ref_nhwc(x_nhwc, model.w1, model.b1)
    t = _conv_ref_nhwc(t, model.w2, model.b2)
    t = _conv_ref_nhwc(t, model.w3, model.b3)
    ref = jnp.transpose(t, (0, 3, 1, 2))

    err = float(jnp.max(jnp.abs(out - ref)))
    assert jnp.allclose(out, ref, atol=5e-4, rtol=5e-4), err
    print("KERNEL_OK")
</pallas_src>

<mosaic_0001>
module attributes {stable_mosaic.version = 11 : i64} {
  func.func @kernel(%arg0: i32, %arg1: memref<1x16x64xf32, #tpu.memory_space<vmem>>, %arg2: memref<7x64x128xf32, #tpu.memory_space<vmem>>, %arg3: memref<1x128xf32, #tpu.memory_space<vmem>>, %arg4: memref<7x128x128xf32, #tpu.memory_space<vmem>>, %arg5: memref<1x128xf32, #tpu.memory_space<vmem>>, %arg6: memref<128x64xf32, #tpu.memory_space<vmem>>, %arg7: memref<1x64xf32, #tpu.memory_space<vmem>>, %arg8: memref<1x16x64xf32, #tpu.memory_space<vmem>>, %arg9: memref<32x64xf32, #tpu.memory_space<vmem>>, %arg10: memref<32x128xf32, #tpu.memory_space<vmem>>) attributes {dimension_semantics = [#tpu.dimension_semantics<parallel>], iteration_bounds = array<i64: 2>, scalar_prefetch = 0 : i64, scratch_operands = 2 : i64, tpu.core_type = #tpu.core_type<tc>, window_params = [{transform_indices = @transform_0, window_bounds = array<i64: 1, 16, 64>}, {pipeline_mode = #tpu.pipeline_mode<synchronous>, transform_indices = @transform_1, window_bounds = array<i64: 7, 64, 128>}, {pipeline_mode = #tpu.pipeline_mode<synchronous>, transform_indices = @transform_2, window_bounds = array<i64: 1, 128>}, {pipeline_mode = #tpu.pipeline_mode<synchronous>, transform_indices = @transform_3, window_bounds = array<i64: 7, 128, 128>}, {pipeline_mode = #tpu.pipeline_mode<synchronous>, transform_indices = @transform_4, window_bounds = array<i64: 1, 128>}, {pipeline_mode = #tpu.pipeline_mode<synchronous>, transform_indices = @transform_5, window_bounds = array<i64: 128, 64>}, {pipeline_mode = #tpu.pipeline_mode<synchronous>, transform_indices = @transform_6, window_bounds = array<i64: 1, 64>}, {transform_indices = @transform_7, window_bounds = array<i64: 1, 16, 64>}]} {
    %c0 = arith.constant 0 : index
    %c0_0 = arith.constant 0 : index
    %c0_1 = arith.constant 0 : index
    %0 = vector.load %arg1[%c0, %c0_0, %c0_1] : memref<1x16x64xf32, #tpu.memory_space<vmem>>, vector<1x16x64xf32>
    %1 = vector.shape_cast %0 : vector<1x16x64xf32> to vector<16x64xf32>
    %cst = arith.constant 0.000000e+00 : f32
    %2 = vector.broadcast %cst : f32 to vector<32x64xf32>
    %c0_2 = arith.constant 0 : index
    %c0_3 = arith.constant 0 : index
    %3 = vector.load %arg9[%c0_2, %c0_3] : memref<32x64xf32, #tpu.memory_space<vmem>>, vector<32x64xf32>
    tpu.vector_store %arg9[%c0_2, %c0_3], %2 {strides = array<i32>} : memref<32x64xf32, #tpu.memory_space<vmem>>, vector<32x64xf32>,
    %c8 = arith.constant 8 : index
    %c0_4 = arith.constant 0 : index
    %4 = vector.load %arg9[%c8, %c0_4] : memref<32x64xf32, #tpu.memory_space<vmem>>, vector<16x64xf32>
    tpu.vector_store %arg9[%c8, %c0_4], %1 {strides = array<i32>} : memref<32x64xf32, #tpu.memory_space<vmem>>, vector<16x64xf32>,
    %cst_5 = arith.constant 0.000000e+00 : f32
    %5 = vector.broadcast %cst_5 : f32 to vector<16x128xf32>
    %c5 = arith.constant 5 : index
    %c0_6 = arith.constant 0 : index
    %6 = vector.load %arg9[%c5, %c0_6] : memref<32x64xf32, #tpu.memory_space<vmem>>, vector<16x64xf32>
    %c0_7 = arith.constant 0 : index
    %c0_8 = arith.constant 0 : index
    %c0_9 = arith.constant 0 : index
    %7 = vector.load %arg2[%c0_7, %c0_8, %c0_9] : memref<7x64x128xf32, #tpu.memory_space<vmem>>, vector<1x64x128xf32>
    %8 = vector.shape_cast %7 : vector<1x64x128xf32> to vector<64x128xf32>
    %cst_10 = arith.constant dense<0.000000e+00> : vector<16x128xf32>
    %9 = tpu.matmul %6, %8, %cst_10 {dimension_numbers = #tpu.dot_dimension_numbers<[1], [0], [0], [1], [0, 0, 1, 1], [], []>} : vector<16x64xf32>, vector<64x128xf32>, vector<16x128xf32> -> vector<16x128xf32>
    %10 = arith.addf %5, %9 : vector<16x128xf32>
    %c6 = arith.constant 6 : index
    %c0_11 = arith.constant 0 : index
    %11 = vector.load %arg9[%c6, %c0_11] : memref<32x64xf32, #tpu.memory_space<vmem>>, vector<16x64xf32>
    %c1 = arith.constant 1 : index
    %c0_12 = arith.constant 0 : index
    %c0_13 = arith.constant 0 : index
    %12 = vector.load %arg2[%c1, %c0_12, %c0_13] : memref<7x64x128xf32, #tpu.memory_space<vmem>>, vector<1x64x128xf32>
    %13 = vector.shape_cast %12 : vector<1x64x128xf32> to vector<64x128xf32>
    %cst_14 = arith.constant dense<0.000000e+00> : vector<16x128xf32>
    %14 = tpu.matmul %11, %13, %cst_14 {dimension_numbers = #tpu.dot_dimension_numbers<[1], [0], [0], [1], [0, 0, 1, 1], [], []>} : vector<16x64xf32>, vector<64x128xf32>, vector<16x128xf32> -> vector<16x128xf32>
    %15 = arith.addf %10, %14 : vector<16x128xf32>
    %c7 = arith.constant 7 : index
    %c0_15 = arith.constant 0 : index
    %16 = vector.load %arg9[%c7, %c0_15] : memref<32x64xf32, #tpu.memory_space<vmem>>, vector<16x64xf32>
    %c2 = arith.constant 2 : index
    %c0_16 = arith.constant 0 : index
    %c0_17 = arith.constant 0 : index
    %17 = vector.load %arg2[%c2, %c0_16, %c0_17] : memref<7x64x128xf32, #tpu.memory_space<vmem>>, vector<1x64x128xf32>
    %18 = vector.shape_cast %17 : vector<1x64x128xf32> to vector<64x128xf32>
    %cst_18 = arith.constant dense<0.000000e+00> : vector<16x128xf32>
    %19 = tpu.matmul %16, %18, %cst_18 {dimension_numbers = #tpu.dot_dimension_numbers<[1], [0], [0], [1], [0, 0, 1, 1], [], []>} : vector<16x64xf32>, vector<64x128xf32>, vector<16x128xf32> -> vector<16x128xf32>
    %20 = arith.addf %15, %19 : vector<16x128xf32>
    %c8_19 = arith.constant 8 : index
    %c0_20 = arith.constant 0 : index
    %21 = vector.load %arg9[%c8_19, %c0_20] : memref<32x64xf32, #tpu.memory_space<vmem>>, vector<16x64xf32>
    %c3 = arith.constant 3 : index
    %c0_21 = arith.constant 0 : index
    %c0_22 = arith.constant 0 : index
    %22 = vector.load %arg2[%c3, %c0_21, %c0_22] : memref<7x64x128xf32, #tpu.memory_space<vmem>>, vector<1x64x128xf32>
    %23 = vector.shape_cast %22 : vector<1x64x128xf32> to vector<64x128xf32>
    %cst_23 = arith.constant dense<0.000000e+00> : vector<16x128xf32>
    %24 = tpu.matmul %21, %23, %cst_23 {dimension_numbers = #tpu.dot_dimension_numbers<[1], [0], [0], [1], [0, 0, 1, 1], [], []>} : vector<16x64xf32>, vector<64x128xf32>, vector<16x128xf32> -> vector<16x128xf32>
    %25 = arith.addf %20, %24 : vector<16x128xf32>
    %c9 = arith.constant 9 : index
    %c0_24 = arith.constant 0 : index
    %26 = vector.load %arg9[%c9, %c0_24] : memref<32x64xf32, #tpu.memory_space<vmem>>, vector<16x64xf32>
    %c4 = arith.constant 4 : index
    %c0_25 = arith.constant 0 : index
    %c0_26 = arith.constant 0 : index
    %27 = vector.load %arg2[%c4, %c0_25, %c0_26] : memref<7x64x128xf32, #tpu.memory_space<vmem>>, vector<1x64x128xf32>
    %28 = vector.shape_cast %27 : vector<1x64x128xf32> to vector<64x128xf32>
    %cst_27 = arith.constant dense<0.000000e+00> : vector<16x128xf32>
    %29 = tpu.matmul %26, %28, %cst_27 {dimension_numbers = #tpu.dot_dimension_numbers<[1], [0], [0], [1], [0, 0, 1, 1], [], []>} : vector<16x64xf32>, vector<64x128xf32>, vector<16x128xf32> -> vector<16x128xf32>
    %30 = arith.addf %25, %29 : vector<16x128xf32>
    %c10 = arith.constant 10 : index
    %c0_28 = arith.constant 0 : index
    %31 = vector.load %arg9[%c10, %c0_28] : memref<32x64xf32, #tpu.memory_space<vmem>>, vector<16x64xf32>
    %c5_29 = arith.constant 5 : index
    %c0_30 = arith.constant 0 : index
    %c0_31 = arith.constant 0 : index
    %32 = vector.load %arg2[%c5_29, %c0_30, %c0_31] : memref<7x64x128xf32, #tpu.memory_space<vmem>>, vector<1x64x128xf32>
    %33 = vector.shape_cast %32 : vector<1x64x128xf32> to vector<64x128xf32>
    %cst_32 = arith.constant dense<0.000000e+00> : vector<16x128xf32>
    %34 = tpu.matmul %31, %33, %cst_32 {dimension_numbers = #tpu.dot_dimension_numbers<[1], [0], [0], [1], [0, 0, 1, 1], [], []>} : vector<16x64xf32>, vector<64x128xf32>, vector<16x128xf32> -> vector<16x128xf32>
    %35 = arith.addf %30, %34 : vector<16x128xf32>
    %c11 = arith.constant 11 : index
    %c0_33 = arith.constant 0 : index
    %36 = vector.load %arg9[%c11, %c0_33] : memref<32x64xf32, #tpu.memory_space<vmem>>, vector<16x64xf32>
    %c6_34 = arith.constant 6 : index
    %c0_35 = arith.constant 0 : index
    %c0_36 = arith.constant 0 : index
    %37 = vector.load %arg2[%c6_34, %c0_35, %c0_36] : memref<7x64x128xf32, #tpu.memory_space<vmem>>, vector<1x64x128xf32>
    %38 = vector.shape_cast %37 : vector<1x64x128xf32> to vector<64x128xf32>
    %cst_37 = arith.constant dense<0.000000e+00> : vector<16x128xf32>
    %39 = tpu.matmul %36, %38, %cst_37 {dimension_numbers = #tpu.dot_dimension_numbers<[1], [0], [0], [1], [0, 0, 1, 1], [], []>} : vector<16x64xf32>, vector<64x128xf32>, vector<16x128xf32> -> vector<16x128xf32>
    %40 = arith.addf %35, %39 : vector<16x128xf32>
    %c0_38 = arith.constant 0 : index
    %c0_39 = arith.constant 0 : index
    %41 = vector.load %arg3[%c0_38, %c0_39] : memref<1x128xf32, #tpu.memory_space<vmem>>, vector<1x128xf32>
    %42 = vector.broadcast %41 : vector<1x128xf32> to vector<16x128xf32>
    %43 = arith.addf %40, %42 : vector<16x128xf32>
    %cst_40 = arith.constant 0.000000e+00 : f32
    %44 = vector.broadcast %cst_40 : f32 to vector<32x128xf32>
    %c0_41 = arith.constant 0 : index
    %c0_42 = arith.constant 0 : index
    %45 = vector.load %arg10[%c0_41, %c0_42] : memref<32x128xf32, #tpu.memory_space<vmem>>, vector<32x128xf32>
    tpu.vector_store %arg10[%c0_41, %c0_42], %44 {strides = array<i32>} : memref<32x128xf32, #tpu.memory_space<vmem>>, vector<32x128xf32>,
    %c8_43 = arith.constant 8 : index
    %c0_44 = arith.constant 0 : index
    %46 = vector.load %arg10[%c8_43, %c0_44] : memref<32x128xf32, #tpu.memory_space<vmem>>, vector<16x128xf32>
    tpu.vector_store %arg10[%c8_43, %c0_44], %43 {strides = array<i32>} : memref<32x128xf32, #tpu.memory_space<vmem>>, vector<16x128xf32>,
    %cst_45 = arith.constant 0.000000e+00 : f32
    %47 = vector.broadcast %cst_45 : f32 to vector<16x128xf32>
    %c5_46 = arith.constant 5 : index
    %c0_47 = arith.constant 0 : index
    %48 = vector.load %arg10[%c5_46, %c0_47] : memref<32x128xf32, #tpu.memory_space<vmem>>, vector<16x128xf32>
    %c0_48 = arith.constant 0 : index
    %c0_49 = arith.constant 0 : index
    %c0_50 = arith.constant 0 : index
    %49 = vector.load %arg4[%c0_48, %c0_49, %c0_50] : memref<7x128x128xf32, #tpu.memory_space<vmem>>, vector<1x128x128xf32>
    %50 = vector.shape_cast %49 : vector<1x128x128xf32> to vector<128x128xf32>
    %cst_51 = arith.constant dense<0.000000e+00> : vector<16x128xf32>
    %51 = tpu.matmul %48, %50, %cst_51 {dimension_numbers = #tpu.dot_dimension_numbers<[1], [0], [0], [1], [0, 0, 1, 1], [], []>} : vector<16x128xf32>, vector<128x128xf32>, vector<16x128xf32> -> vector<16x128xf32>
    %52 = arith.addf %47, %51 : vector<16x128xf32>
    %c6_52 = arith.constant 6 : index
    %c0_53 = arith.constant 0 : index
    %53 = vector.load %arg10[%c6_52, %c0_53] : memref<32x128xf32, #tpu.memory_space<vmem>>, vector<16x128xf32>
    %c1_54 = arith.constant 1 : index
    %c0_55 = arith.constant 0 : index
    %c0_56 = arith.constant 0 : index
    %54 = vector.load %arg4[%c1_54, %c0_55, %c0_56] : memref<7x128x128xf32, #tpu.memory_space<vmem>>, vector<1x128x128xf32>
    %55 = vector.shape_cast %54 : vector<1x128x128xf32> to vector<128x128xf32>
    %cst_57 = arith.constant dense<0.000000e+00> : vector<16x128xf32>
    %56 = tpu.matmul %53, %55, %cst_57 {dimension_numbers = #tpu.dot_dimension_numbers<[1], [0], [0], [1], [0, 0, 1, 1], [], []>} : vector<16x128xf32>, vector<128x128xf32>, vector<16x128xf32> -> vector<16x128xf32>
    %57 = arith.addf %52, %56 : vector<16x128xf32>
    %c7_58 = arith.constant 7 : index
    %c0_59 = arith.constant 0 : index
    %58 = vector.load %arg10[%c7_58, %c0_59] : memref<32x128xf32, #tpu.memory_space<vmem>>, vector<16x128xf32>
    %c2_60 = arith.constant 2 : index
    %c0_61 = arith.constant 0 : index
    %c0_62 = arith.constant 0 : index
    %59 = vector.load %arg4[%c2_60, %c0_61, %c0_62] : memref<7x128x128xf32, #tpu.memory_space<vmem>>, vector<1x128x128xf32>
    %60 = vector.shape_cast %59 : vector<1x128x128xf32> to vector<128x128xf32>
    %cst_63 = arith.constant dense<0.000000e+00> : vector<16x128xf32>
    %61 = tpu.matmul %58, %60, %cst_63 {dimension_numbers = #tpu.dot_dimension_numbers<[1], [0], [0], [1], [0, 0, 1, 1], [], []>} : vector<16x128xf32>, vector<128x128xf32>, vector<16x128xf32> -> vector<16x128xf32>
    %62 = arith.addf %57, %61 : vector<16x128xf32>
    %c8_64 = arith.constant 8 : index
    %c0_65 = arith.constant 0 : index
    %63 = vector.load %arg10[%c8_64, %c0_65] : memref<32x128xf32, #tpu.memory_space<vmem>>, vector<16x128xf32>
    %c3_66 = arith.constant 3 : index
    %c0_67 = arith.constant 0 : index
    %c0_68 = arith.constant 0 : index
    %64 = vector.load %arg4[%c3_66, %c0_67, %c0_68] : memref<7x128x128xf32, #tpu.memory_space<vmem>>, vector<1x128x128xf32>
    %65 = vector.shape_cast %64 : vector<1x128x128xf32> to vector<128x128xf32>
    %cst_69 = arith.constant dense<0.000000e+00> : vector<16x128xf32>
    %66 = tpu.matmul %63, %65, %cst_69 {dimension_numbers = #tpu.dot_dimension_numbers<[1], [0], [0], [1], [0, 0, 1, 1], [], []>} : vector<16x128xf32>, vector<128x128xf32>, vector<16x128xf32> -> vector<16x128xf32>
    %67 = arith.addf %62, %66 : vector<16x128xf32>
    %c9_70 = arith.constant 9 : index
    %c0_71 = arith.constant 0 : index
    %68 = vector.load %arg10[%c9_70, %c0_71] : memref<32x128xf32, #tpu.memory_space<vmem>>, vector<16x128xf32>
    %c4_72 = arith.constant 4 : index
    %c0_73 = arith.constant 0 : index
    %c0_74 = arith.constant 0 : index
    %69 = vector.load %arg4[%c4_72, %c0_73, %c0_74] : memref<7x128x128xf32, #tpu.memory_space<vmem>>, vector<1x128x128xf32>
    %70 = vector.shape_cast %69 : vector<1x128x128xf32> to vector<128x128xf32>
    %cst_75 = arith.constant dense<0.000000e+00> : vector<16x128xf32>
    %71 = tpu.matmul %68, %70, %cst_75 {dimension_numbers = #tpu.dot_dimension_numbers<[1], [0], [0], [1], [0, 0, 1, 1], [], []>} : vector<16x128xf32>, vector<128x128xf32>, vector<16x128xf32> -> vector<16x128xf32>
    %72 = arith.addf %67, %71 : vector<16x128xf32>
    %c10_76 = arith.constant 10 : index
    %c0_77 = arith.constant 0 : index
    %73 = vector.load %arg10[%c10_76, %c0_77] : memref<32x128xf32, #tpu.memory_space<vmem>>, vector<16x128xf32>
    %c5_78 = arith.constant 5 : index
    %c0_79 = arith.constant 0 : index
    %c0_80 = arith.constant 0 : index
    %74 = vector.load %arg4[%c5_78, %c0_79, %c0_80] : memref<7x128x128xf32, #tpu.memory_space<vmem>>, vector<1x128x128xf32>
    %75 = vector.shape_cast %74 : vector<1x128x128xf32> to vector<128x128xf32>
    %cst_81 = arith.constant dense<0.000000e+00> : vector<16x128xf32>
    %76 = tpu.matmul %73, %75, %cst_81 {dimension_numbers = #tpu.dot_dimension_numbers<[1], [0], [0], [1], [0, 0, 1, 1], [], []>} : vector<16x128xf32>, vector<128x128xf32>, vector<16x128xf32> -> vector<16x128xf32>
    %77 = arith.addf %72, %76 : vector<16x128xf32>
    %c11_82 = arith.constant 11 : index
    %c0_83 = arith.constant 0 : index
    %78 = vector.load %arg10[%c11_82, %c0_83] : memref<32x128xf32, #tpu.memory_space<vmem>>, vector<16x128xf32>
    %c6_84 = arith.constant 6 : index
    %c0_85 = arith.constant 0 : index
    %c0_86 = arith.constant 0 : index
    %79 = vector.load %arg4[%c6_84, %c0_85, %c0_86] : memref<7x128x128xf32, #tpu.memory_space<vmem>>, vector<1x128x128xf32>
    %80 = vector.shape_cast %79 : vector<1x128x128xf32> to vector<128x128xf32>
    %cst_87 = arith.constant dense<0.000000e+00> : vector<16x128xf32>
    %81 = tpu.matmul %78, %80, %cst_87 {dimension_numbers = #tpu.dot_dimension_numbers<[1], [0], [0], [1], [0, 0, 1, 1], [], []>} : vector<16x128xf32>, vector<128x128xf32>, vector<16x128xf32> -> vector<16x128xf32>
    %82 = arith.addf %77, %81 : vector<16x128xf32>
    %c0_88 = arith.constant 0 : index
    %c0_89 = arith.constant 0 : index
    %83 = vector.load %arg5[%c0_88, %c0_89] : memref<1x128xf32, #tpu.memory_space<vmem>>, vector<1x128xf32>
    %84 = vector.broadcast %83 : vector<1x128xf32> to vector<16x128xf32>
    %85 = arith.addf %82, %84 : vector<16x128xf32>
    %c0_90 = arith.constant 0 : index
    %c0_91 = arith.constant 0 : index
    %86 = vector.load %arg6[%c0_90, %c0_91] : memref<128x64xf32, #tpu.memory_space<vmem>>, vector<128x64xf32>
    %cst_92 = arith.constant dense<0.000000e+00> : vector<16x64xf32>
    %87 = tpu.matmul %85, %86, %cst_92 {dimension_numbers = #tpu.dot_dimension_numbers<[1], [0], [0], [1], [0, 0, 1, 1], [], []>} : vector<16x128xf32>, vector<128x64xf32>, vector<16x64xf32> -> vector<16x64xf32>
    %c0_93 = arith.constant 0 : index
    %c0_94 = arith.constant 0 : index
    %88 = vector.load %arg7[%c0_93, %c0_94] : memref<1x64xf32, #tpu.memory_space<vmem>>, vector<1x64xf32>
    %89 = vector.broadcast %88 : vector<1x64xf32> to vector<16x64xf32>
    %90 = arith.addf %87, %89 : vector<16x64xf32>
    %c0_95 = arith.constant 0 : index
    %c0_96 = arith.constant 0 : index
    %c0_97 = arith.constant 0 : index
    %91 = vector.load %arg8[%c0_95, %c0_96, %c0_97] : memref<1x16x64xf32, #tpu.memory_space<vmem>>, vector<1x16x64xf32>
    %92 = vector.shape_cast %91 : vector<1x16x64xf32> to vector<16x64xf32>
    %93 = vector.shape_cast %90 : vector<16x64xf32> to vector<1x16x64xf32>
    tpu.vector_store %arg8[%c0_95, %c0_96, %c0_97], %93 {strides = array<i32>} : memref<1x16x64xf32, #tpu.memory_space<vmem>>, vector<1x16x64xf32>,
    return
  }
  func.func @transform_0(%arg0: i32) -> (i32, i32, i32) {
    %c0_i32 = arith.constant 0 : i32
    %c0_i32_0 = arith.constant 0 : i32
    %c0_i32_1 = arith.constant 0 : i32
    return %arg0, %c0_i32, %c0_i32_0 : i32, i32, i32
  }
  func.func @transform_1(%arg0: i32) -> (i32, i32, i32) {
    %c0_i32 = arith.constant 0 : i32
    %c0_i32_0 = arith.constant 0 : i32
    %c0_i32_1 = arith.constant 0 : i32
    %c0_i32_2 = arith.constant 0 : i32
    return %c0_i32, %c0_i32_0, %c0_i32_1 : i32, i32, i32
  }
  func.func @transform_2(%arg0: i32) -> (i32, i32) {
    %c0_i32 = arith.constant 0 : i32
    %c0_i32_0 = arith.constant 0 : i32
    %c0_i32_1 = arith.constant 0 : i32
    return %c0_i32, %c0_i32_0 : i32, i32
  }
  func.func @transform_3(%arg0: i32) -> (i32, i32, i32) {
    %c0_i32 = arith.constant 0 : i32
    %c0_i32_0 = arith.constant 0 : i32
    %c0_i32_1 = arith.constant 0 : i32
    %c0_i32_2 = arith.constant 0 : i32
    return %c0_i32, %c0_i32_0, %c0_i32_1 : i32, i32, i32
  }
  func.func @transform_4(%arg0: i32) -> (i32, i32) {
    %c0_i32 = arith.constant 0 : i32
    %c0_i32_0 = arith.constant 0 : i32
    %c0_i32_1 = arith.constant 0 : i32
    return %c0_i32, %c0_i32_0 : i32, i32
  }
  func.func @transform_5(%arg0: i32) -> (i32, i32) {
    %c0_i32 = arith.constant 0 : i32
    %c0_i32_0 = arith.constant 0 : i32
    %c0_i32_1 = arith.constant 0 : i32
    return %c0_i32, %c0_i32_0 : i32, i32
  }
  func.func @transform_6(%arg0: i32) -> (i32, i32) {
    %c0_i32 = arith.constant 0 : i32
    %c0_i32_0 = arith.constant 0 : i32
    %c0_i32_1 = arith.constant 0 : i32
    return %c0_i32, %c0_i32_0 : i32, i32
  }
  func.func @transform_7(%arg0: i32) -> (i32, i32, i32) {
    %c0_i32 = arith.constant 0 : i32
    %c0_i32_0 = arith.constant 0 : i32
    %c0_i32_1 = arith.constant 0 : i32
    return %arg0, %c0_i32, %c0_i32_0 : i32, i32, i32
  }
}

</mosaic_0001>

<llo_original>
// kernel: tpu_custom_call.1
$region0: #{tpu_custom_call.1}
  #allocation0 [shape = 'u32[]', space=smem, size = 0x4, offset = 0x4, fixed_abs, tag = 'smem constant byte address 0x4 - core index']
  #allocation1 [shape = 'u32[144,128]{1,0:T(1,128)}', space=vmem, size = 0x12000, scoped, tag = 'internal scratch']
  #allocation2 [shape = 'f32[32,64]{1,0:T(8,128)}', space=vmem, size = 0x4000, scoped, tag = 'scratch operand']
  #allocation3 [shape = 'f32[32,128]{1,0:T(8,128)}', space=vmem, size = 0x4000, scoped, tag = 'scratch operand']
  %s0 = inlined_call_operand.vmem [shape: f32[2,16,64], index: 0, kind: input, shape index: {}]
  %s1 = inlined_call_operand.hbm [shape: f32[7,64,128], index: 1, kind: input, shape index: {}]
  %s2 = inlined_call_operand.vmem [shape: f32[1,128], index: 2, kind: input, shape index: {}]
  %s3 = inlined_call_operand.hbm [shape: f32[7,128,128], index: 3, kind: input, shape index: {}]
  %s4 = inlined_call_operand.vmem [shape: f32[1,128], index: 4, kind: input, shape index: {}]
  %s5 = inlined_call_operand.vmem [shape: f32[128,64], index: 5, kind: input, shape index: {}]
  %s6 = inlined_call_operand.vmem [shape: f32[1,64], index: 6, kind: input, shape index: {}]
  %s7 = inlined_call_operand.hbm [shape: f32[2,16,64], index: 7, kind: output, shape index: {}]
  %s8 = sld [smem:[#allocation0]]
  $region69: #{tpu_custom_call.1} parent=0
    _
  %s10 = ssub.s32 1, %s8
  %s11 = scalar_select 0, %s10, %s8
  $region1: #{tpu_custom_call.1} parent=0
    #allocation4 [shape = 'u8[229376]{0}', space=vmem, size = 0x38000, scoped, tag = 'input window, operand 1, single buffered']
    #allocation5 [shape = 's32[2]{0}', space=sflag, size = 0x8, scoped, tag = 'scoped memory for tpu_custom_call.1']
    #allocation6 [shape = 's32[2]{0}', space=sflag, size = 0x8, scoped, tag = 'scoped memory for tpu_custom_call.1']
    #allocation7 [shape = 'u8[458752]{0}', space=vmem, size = 0x70000, scoped, tag = 'input window, operand 3, single buffered']
    #allocation8 [shape = 's32[1]{0}', space=sflag, size = 0x4, scoped, tag = 'scoped memory for tpu_custom_call.1']
    #allocation9 [shape = 'u8[16384]{0}', space=vmem, size = 0x4000, scoped, tag = 'output window, operand 0']
    %12 = vsyncpa [#allocation5], 0
    %13 = vsyncpa [#allocation8], 0
    %14 = vsyncpa [#allocation6], 0
    %s15 = scalar_lea.sflag [#allocation6], 1
    %16 = vsyncpa %s15, 0
    loop: start=0, step=1, limit=4
    $region2: #{tpu_custom_call.1} parent=1 // loop_pre_header
      _
    $region3: #{tpu_custom_call.1} parent=1 // loop_header
      %s18 = sphi 0, %s22
      %p19 = scmp.ge.s32.totalorder %s18, 4
      %s28 = sphi 0, %s30
      %s31 = sphi 0, %s28
      %s32 = sphi 0, %s31
      %s48 = sphi 0, %s32
      %s52 = sphi 0, %s52
      %s54 = sphi 0, %s52
      %s55 = sphi 0, %s54
      %s69 = sphi 0, %s55
      %s73 = sphi 0, %s73
      %s75 = sphi 0, %s73
      %s76 = sphi 0, %s75
      %s90 = sphi 0, %s76
      %s94 = sphi 0, %s94
      %s96 = sphi 0, %s94
      %s97 = sphi 0, %s96
      %s111 = sphi 0, %s97
      %s115 = sphi 0, %s115
      %s117 = sphi 0, %s115
      %s118 = sphi 0, %s117
      %s132 = sphi 0, %s118
      %s136 = sphi 0, %s136
      %s138 = sphi 0, %s136
      %s139 = sphi 0, %s138
      %s153 = sphi 0, %s139
      %s157 = sphi 0, %s157
      %s159 = sphi 0, %s157
      %s160 = sphi 0, %s159
      %s174 = sphi 0, %s160
      %s180 = sphi 0, %s182
      %s183 = sphi 0, %s180
      %s184 = sphi 0, %s183
      %s200 = sphi 0, %s184
    $region4: #{tpu_custom_call.1} parent=1 // loop_header_branch
      %21 = sbr.rel (%p19) target = $region8
    $region5: #{tpu_custom_call.1} parent=1 // loop_body
      %s23 = ssub.s32 %s18, 1
      %s24 = ssub.s32 %s18, 2
      %s25 = sadd.s32 %s18, 1
      %s26 = ssub.s32 %s18, %s25
      %p27 = scmp.eq.s32.totalorder %s26, 0
      %s29 = sadd.s32 %s28, 1
      %s30 = scalar_select %p27, %s28, %s29
      %p33 = pneg %p27
      %p34 = scmp.eq.s32.totalorder %s18, 1
      %p35 = por %p33, %p34
      %p36 = scmp.ne.s32.totalorder %s28, %s31
      %p37 = scmp.eq.s32.totalorder %s18, 0
      %p38 = por %p36, %p37
      %p39 = scmp.ne.s32.totalorder %s28, %s31
      %p40 = scmp.eq.s32.totalorder %s23, 1
      %p41 = por %p39, %p40
      %p42 = scmp.ne.s32.totalorder %s31, %s32
      %p43 = scmp.eq.s32.totalorder %s23, 0
      %p44 = por %p42, %p43
      %p45 = scmp.ne.s32.totalorder %s31, %s32
      %p46 = scmp.eq.s32.totalorder %s24, 1
      %p47 = por %p45, %p46
      %p49 = scmp.ne.s32.totalorder %s32, %s48
      %p50 = scmp.eq.s32.totalorder %s24, 0
      %p51 = por %p49, %p50
      %s53 = sadd.s32 %s52, 1
      %p56 = scmp.eq.s32.totalorder %s18, 1
      %p57 = scmp.ne.s32.totalorder %s52, %s54
      %p58 = scmp.eq.s32.totalorder %s18, 0
      %p59 = por %p57, %p58
      %p60 = scmp.ne.s32.totalorder %s52, %s54
      %p61 = scmp.eq.s32.totalorder %s23, 1
      %p62 = por %p60, %p61
      %p63 = scmp.ne.s32.totalorder %s54, %s55
      %p64 = scmp.eq.s32.totalorder %s23, 0
      %p65 = por %p63, %p64
      %p66 = scmp.ne.s32.totalorder %s54, %s55
      %p67 = scmp.eq.s32.totalorder %s24, 1
      %p68 = por %p66, %p67
      %p70 = scmp.ne.s32.totalorder %s55, %s69
      %p71 = scmp.eq.s32.totalorder %s24, 0
      %p72 = por %p70, %p71
      %s74 = sadd.s32 %s73, 1
      %p77 = scmp.eq.s32.totalorder %s18, 1
      %p78 = scmp.ne.s32.totalorder %s73, %s75
      %p79 = scmp.eq.s32.totalorder %s18, 0
      %p80 = por %p78, %p79
      %p81 = scmp.ne.s32.totalorder %s73, %s75
      %p82 = scmp.eq.s32.totalorder %s23, 1
      %p83 = por %p81, %p82
      %p84 = scmp.ne.s32.totalorder %s75, %s76
      %p85 = scmp.eq.s32.totalorder %s23, 0
      %p86 = por %p84, %p85
      %p87 = scmp.ne.s32.totalorder %s75, %s76
      %p88 = scmp.eq.s32.totalorder %s24, 1
      %p89 = por %p87, %p88
      %p91 = scmp.ne.s32.totalorder %s76, %s90
      %p92 = scmp.eq.s32.totalorder %s24, 0
      %p93 = por %p91, %p92
      %s95 = sadd.s32 %s94, 1
      %p98 = scmp.eq.s32.totalorder %s18, 1
      %p99 = scmp.ne.s32.totalorder %s94, %s96
      %p100 = scmp.eq.s32.totalorder %s18, 0
      %p101 = por %p99, %p100
      %p102 = scmp.ne.s32.totalorder %s94, %s96
      %p103 = scmp.eq.s32.totalorder %s23, 1
      %p104 = por %p102, %p103
      %p105 = scmp.ne.s32.totalorder %s96, %s97
      %p106 = scmp.eq.s32.totalorder %s23, 0
      %p107 = por %p105, %p106
      %p108 = scmp.ne.s32.totalorder %s96, %s97
      %p109 = scmp.eq.s32.totalorder %s24, 1
      %p110 = por %p108, %p109
      %p112 = scmp.ne.s32.totalorder %s97, %s111
      %p113 = scmp.eq.s32.totalorder %s24, 0
      %p114 = por %p112, %p113
      %s116 = sadd.s32 %s115, 1
      %p119 = scmp.eq.s32.totalorder %s18, 1
      %p120 = scmp.ne.s32.totalorder %s115, %s117
      %p121 = scmp.eq.s32.totalorder %s18, 0
      %p122 = por %p120, %p121
      %p123 = scmp.ne.s32.totalorder %s115, %s117
      %p124 = scmp.eq.s32.totalorder %s23, 1
      %p125 = por %p123, %p124
      %p126 = scmp.ne.s32.totalorder %s117, %s118
      %p127 = scmp.eq.s32.totalorder %s23, 0
      %p128 = por %p126, %p127
      %p129 = scmp.ne.s32.totalorder %s117, %s118
      %p130 = scmp.eq.s32.totalorder %s24, 1
      %p131 = por %p129, %p130
      %p133 = scmp.ne.s32.totalorder %s118, %s132
      %p134 = scmp.eq.s32.totalorder %s24, 0
      %p135 = por %p133, %p134
      %s137 = sadd.s32 %s136, 1
      %p140 = scmp.eq.s32.totalorder %s18, 1
      %p141 = scmp.ne.s32.totalorder %s136, %s138
      %p142 = scmp.eq.s32.totalorder %s18, 0
      %p143 = por %p141, %p142
      %p144 = scmp.ne.s32.totalorder %s136, %s138
      %p145 = scmp.eq.s32.totalorder %s23, 1
      %p146 = por %p144, %p145
      %p147 = scmp.ne.s32.totalorder %s138, %s139
      %p148 = scmp.eq.s32.totalorder %s23, 0
      %p149 = por %p147, %p148
      %p150 = scmp.ne.s32.totalorder %s138, %s139
      %p151 = scmp.eq.s32.totalorder %s24, 1
      %p152 = por %p150, %p151
      %p154 = scmp.ne.s32.totalorder %s139, %s153
      %p155 = scmp.eq.s32.totalorder %s24, 0
      %p156 = por %p154, %p155
      %s158 = sadd.s32 %s157, 1
      %p161 = scmp.eq.s32.totalorder %s18, 1
      %p162 = scmp.ne.s32.totalorder %s157, %s159
      %p163 = scmp.eq.s32.totalorder %s18, 0
      %p164 = por %p162, %p163
      %p165 = scmp.ne.s32.totalorder %s157, %s159
      %p166 = scmp.eq.s32.totalorder %s23, 1
      %p167 = por %p165, %p166
      %p168 = scmp.ne.s32.totalorder %s159, %s160
      %p169 = scmp.eq.s32.totalorder %s23, 0
      %p170 = por %p168, %p169
      %p171 = scmp.ne.s32.totalorder %s159, %s160
      %p172 = scmp.eq.s32.totalorder %s24, 1
      %p173 = por %p171, %p172
      %p175 = scmp.ne.s32.totalorder %s160, %s174
      %p176 = scmp.eq.s32.totalorder %s24, 0
      %p177 = por %p175, %p176
      %s178 = ssub.s32 %s18, %s25
      %p179 = scmp.eq.s32.totalorder %s178, 0
      %s181 = sadd.s32 %s180, 1
      %s182 = scalar_select %p179, %s180, %s181
      %p185 = pneg %p179
      %p186 = scmp.eq.s32.totalorder %s18, 1
      %p187 = por %p185, %p186
      %p188 = scmp.ne.s32.totalorder %s180, %s183
      %p189 = scmp.eq.s32.totalorder %s18, 0
      %p190 = por %p188, %p189
      %p191 = scmp.ne.s32.totalorder %s180, %s183
      %p192 = scmp.eq.s32.totalorder %s23, 1
      %p193 = por %p191, %p192
      %p194 = scmp.ne.s32.totalorder %s183, %s184
      %p195 = scmp.eq.s32.totalorder %s23, 0
      %p196 = por %p194, %p195
      %p197 = scmp.ne.s32.totalorder %s183, %s184
      %p198 = scmp.eq.s32.totalorder %s24, 1
      %p199 = por %p197, %p198
      %p201 = scmp.ne.s32.totalorder %s184, %s200
      %p202 = scmp.eq.s32.totalorder %s24, 0
      %p203 = por %p201, %p202
      %p204 = scmp.le.s32.totalorder 1, %s18
      %p205 = scmp.lt.s32.totalorder %s18, 3
      %p206 = pnand %p204, %p205
      %p207 = pneg %p206
      // Predicated region
      $region9: #{tpu_custom_call.1} parent=5 // pred_check
        _
      $region10: #{tpu_custom_call.1} parent=5 // pred_check_branch
        %209 = sbr.rel (%p206) target = $region12
      $region11: #{tpu_custom_call.1} parent=5 // pred_region
        %s210 = ssub.s32 %s18, 1
        // Predicated region
        $region13: #{tpu_custom_call.1} parent=11 // pred_check
          %p211 = pneg %p65
        $region14: #{tpu_custom_call.1} parent=11 // pred_check_branch
          %213 = sbr.rel (%p211) target = $region16
        $region15: #{tpu_custom_call.1} parent=11 // pred_region
          %s215 = ssub.s32 7168, 7168
          %216 = vsyncadd [#allocation5], %s215
          %s217 = sshll.u32 [#allocation4], 4
          %s218 = int_to_ptr.vmem [resolvable:$true] %s217
          %223 = dma.hbm_to_vmem [thread:$0]  %s1, 7168, %s218, [#allocation5], 128, 128, 8
        $region16: #{tpu_custom_call.1} parent=11 // pred_fallthru
          _
        // Predicated region
        $region17: #{tpu_custom_call.1} parent=11 // pred_check
          %p224 = pneg %p86
        $region18: #{tpu_custom_call.1} parent=11 // pred_check_branch
          %226 = sbr.rel (%p224) target = $region20
        $region19: #{tpu_custom_call.1} parent=11 // pred_region
          _
        $region20: #{tpu_custom_call.1} parent=11 // pred_fallthru
          _
        // Predicated region
        $region21: #{tpu_custom_call.1} parent=11 // pred_check
          %p227 = pneg %p107
        $region22: #{tpu_custom_call.1} parent=11 // pred_check_branch
          %229 = sbr.rel (%p227) target = $region24
        $region23: #{tpu_custom_call.1} parent=11 // pred_region
          %s231 = ssub.s32 14336, 14336
          %232 = vsyncadd [#allocation8], %s231
          %s233 = sshll.u32 [#allocation7], 4
          %s234 = int_to_ptr.vmem [resolvable:$true] %s233
          %239 = dma.hbm_to_vmem [thread:$0]  %s3, 14336, %s234, [#allocation8], 128, 128, 8
        $region24: #{tpu_custom_call.1} parent=11 // pred_fallthru
          _
        // Predicated region
        $region25: #{tpu_custom_call.1} parent=11 // pred_check
          %p240 = pneg %p128
        $region26: #{tpu_custom_call.1} parent=11 // pred_check_branch
          %242 = sbr.rel (%p240) target = $region28
        $region27: #{tpu_custom_call.1} parent=11 // pred_region
          _
        $region28: #{tpu_custom_call.1} parent=11 // pred_fallthru
          _
        // Predicated region
        $region29: #{tpu_custom_call.1} parent=11 // pred_check
          %p243 = pneg %p149
        $region30: #{tpu_custom_call.1} parent=11 // pred_check_branch
          %245 = sbr.rel (%p243) target = $region32
        $region31: #{tpu_custom_call.1} parent=11 // pred_region
          _
        $region32: #{tpu_custom_call.1} parent=11 // pred_fallthru
          _
        // Predicated region
        $region33: #{tpu_custom_call.1} parent=11 // pred_check
          %p246 = pneg %p170
        $region34: #{tpu_custom_call.1} parent=11 // pred_check_branch
          %248 = sbr.rel (%p246) target = $region36
        $region35: #{tpu_custom_call.1} parent=11 // pred_region
          _
        $region36: #{tpu_custom_call.1} parent=11 // pred_fallthru
          _
      $region12: #{tpu_custom_call.1} parent=5 // pred_fallthru
        _
      %p249 = scmp.lt.s32.totalorder %s18, 2
      // Predicated region
      $region37: #{tpu_custom_call.1} parent=5 // pred_check
        %p250 = pneg %p249
      $region38: #{tpu_custom_call.1} parent=5 // pred_check_branch
        %252 = sbr.rel (%p250) target = $region40
      $region39: #{tpu_custom_call.1} parent=5 // pred_region
        // Predicated region
        $region41: #{tpu_custom_call.1} parent=39 // pred_check
          %p253 = pneg %p38
        $region42: #{tpu_custom_call.1} parent=39 // pred_check_branch
          %255 = sbr.rel (%p253) target = $region44
        $region43: #{tpu_custom_call.1} parent=39 // pred_region
          %p256 = scmp.lt.s32.totalorder %s18, 1
          %s257 = scalar_select %p256, %s18, 1
          %s258 = smul.addr %s257, 2
          %s259 = smul.addr %s258, 8
          %s260 = scalar_lea.vmem %s0, %s259
        $region44: #{tpu_custom_call.1} parent=39 // pred_fallthru
          _
      $region40: #{tpu_custom_call.1} parent=5 // pred_fallthru
        _
      %p261 = scmp.le.s32.totalorder 1, %s18
      %p262 = scmp.lt.s32.totalorder %s18, 3
      %p263 = pnand %p261, %p262
      %p264 = pneg %p263
      // Predicated region
      $region45: #{tpu_custom_call.1} parent=5 // pred_check
        _
      $region46: #{tpu_custom_call.1} parent=5 // pred_check_branch
        %266 = sbr.rel (%p263) target = $region48
      $region47: #{tpu_custom_call.1} parent=5 // pred_region
        %s267 = ssub.s32 %s18, 1
        // Predicated region
        $region49: #{tpu_custom_call.1} parent=47 // pred_check
          %p268 = pneg %p65
        $region50: #{tpu_custom_call.1} parent=47 // pred_check_branch
          %270 = sbr.rel (%p268) target = $region52
        $region51: #{tpu_custom_call.1} parent=47 // pred_region
          %271 = dma.done [#allocation5], 7168
        $region52: #{tpu_custom_call.1} parent=47 // pred_fallthru
          _
        // Predicated region
        $region53: #{tpu_custom_call.1} parent=47 // pred_check
          %p272 = pneg %p107
        $region54: #{tpu_custom_call.1} parent=47 // pred_check_branch
          %274 = sbr.rel (%p272) target = $region56
        $region55: #{tpu_custom_call.1} parent=47 // pred_region
          %275 = dma.done [#allocation8], 14336
        $region56: #{tpu_custom_call.1} parent=47 // pred_fallthru
          _
        %p276 = scmp.lt.s32.totalorder %s23, 1
        %s277 = scalar_select %p276, %s23, 1
        %s278 = smul.addr %s277, 2
        %s279 = smul.addr %s278, 8
        %s280 = scalar_lea.vmem %s0, %s279
        %p281 = pneg %p44
        %p282 = pneg %p41
        %p283 = pneg %p65
        %p284 = pneg %p62
        %p285 = pneg %p86
        %p286 = pneg %p83
        %p287 = pneg %p107
        %p288 = pneg %p104
        %p289 = pneg %p128
        %p290 = pneg %p125
        %p291 = pneg %p149
        %p292 = pneg %p146
        %p293 = pneg %p170
        %p294 = pneg %p167
        %p295 = pneg %p196
        %p296 = pneg %p193
        %s297 = sand.u32 %s183, 1
        %s298 = scalar_lea.sflag [#allocation6], %s297
        %s299 = sand.u32 %s183, 1
        %s300 = smul.addr %s299, 16
        %s301 = scalar_lea.vmem [#allocation9], %s300
        %p302 = scmp.lt.s32.totalorder %s23, 1
        %s303 = scalar_select %p302, %s23, 1
        %s304 = smul.addr %s303, 2
        %s305 = smul.addr %s304, 8
        %s306 = scalar_lea.vmem %s0, %s305
        %v307 = vld [vmem:[%s306] sm:$0xff]
        %v308 = vld [vmem:[%s306 + $0x8] sm:$0xff]
        %vm309 = vcmask 523264
        %310 = vst.msk [vmem:[#allocation2] sm:$0xff] %vm309, 0.0
        %311 = vst.msk [vmem:[#allocation2 + $0x8] sm:$0xff] %vm309, 0.0
        %312 = vst.msk [vmem:[#allocation2 + $0x10] sm:$0xff] %vm309, 0.0
        %313 = vst.msk [vmem:[#allocation2 + $0x18] sm:$0xff] %vm309, 0.0
        %314 = vst.msk [vmem:[#allocation2 + $0x8] sm:$0xff] %vm309, %v307
        %315 = vst.msk [vmem:[#allocation2 + $0x10] sm:$0xff] %vm309, %v308
        %v316 = vld [vmem:[#allocation2 + $0x5] sm:$0xff]
        %v317 = vld [vmem:[#allocation2 + $0xd] sm:$0xff]
        %v318 = vld [vmem:[#allocation4] sm:$0xff]
        %v319 = vld [vmem:[#allocation4 + $0x8] sm:$0xff]
        %v320 = vld [vmem:[#allocation4 + $0x10] sm:$0xff]
        %v321 = vld [vmem:[#allocation4 + $0x18] sm:$0xff]
        %v322 = vld [vmem:[#allocation4 + $0x20] sm:$0xff]
        %v323 = vld [vmem:[#allocation4 + $0x28] sm:$0xff]
        %v324 = vld [vmem:[#allocation4 + $0x30] sm:$0xff]
        %v325 = vld [vmem:[#allocation4 + $0x38] sm:$0xff]
        %v326 = vld [vmem:[#allocation2 + $0x6] sm:$0xff]
        %v327 = vld [vmem:[#allocation2 + $0xe] sm:$0xff]
        %s328 = scalar_lea.vmem [#allocation4], 64
        %v329 = vld [vmem:[%s328] sm:$0xff]
        %v330 = vld [vmem:[%s328 + $0x8] sm:$0xff]
        %v331 = vld [vmem:[%s328 + $0x10] sm:$0xff]
        %v332 = vld [vmem:[%s328 + $0x18] sm:$0xff]
        %v333 = vld [vmem:[%s328 + $0x20] sm:$0xff]
        %v334 = vld [vmem:[%s328 + $0x28] sm:$0xff]
        %v335 = vld [vmem:[%s328 + $0x30] sm:$0xff]
        %v336 = vld [vmem:[%s328 + $0x38] sm:$0xff]
        %v338 = vsel %vm309, %v326, 0
        %v341 = vsel %vm309, %v327, 0
        %343 = vmatprep.subr.mxu0 0.0
        %344 = vmatpush1.msra.mxu0 0.0
        %345 = vmatprep.subr.mxu0 0.0
        %346 = vmatpush1.msra.mxu0 0.0
        %347 = vmatprep.subr.mxu0 0.0
        %348 = vmatpush1.msra.mxu0 0.0
        %349 = vmatprep.subr.mxu0 0.0
        %350 = vmatpush1.msra.mxu0 0.0
        %351 = vmatprep.subr.mxu0 0.0
        %352 = vmatpush1.msra.mxu0 0.0
        %353 = vmatprep.subr.mxu0 0.0
        %354 = vmatpush1.msra.mxu0 0.0
        %355 = vmatprep.subr.mxu0 0.0
        %356 = vmatpush1.msra.mxu0 0.0
        %357 = vmatprep.subr.mxu0 0.0
        %358 = vmatpush1.msra.mxu0 0.0
        %359 = vmatprep.subr.mxu0 0.0
        %360 = vmatpush1.msra.mxu0 %v336
        %361 = vmatprep.subr.mxu0 0.0
        %362 = vmatpush1.msra.mxu0 %v335
        %363 = vmatprep.subr.mxu0 0.0
        %364 = vmatpush1.msra.mxu0 %v334
        %365 = vmatprep.subr.mxu0 0.0
        %366 = vmatpush1.msra.mxu0 %v333
        %367 = vmatprep.subr.mxu0 0.0
        %368 = vmatpush1.msra.mxu0 %v332
        %369 = vmatprep.subr.mxu0 0.0
        %370 = vmatpush1.msra.mxu0 %v331
        %371 = vmatprep.subr.mxu0 0.0
        %372 = vmatpush1.msra.mxu0 %v330
        %373 = vmatprep.subr.mxu0 0.0
        %374 = vmatpush1.msra.mxu0 %v329
        %375 = vmatprep.subr.mxu0 0.0
        %376 = vmatpush2.msra.mxu0 0.0
        %377 = vmatprep.subr.mxu0 0.0
        %378 = vmatpush2.msra.mxu0 0.0
        %379 = vmatprep.subr.mxu0 0.0
        %380 = vmatpush2.msra.mxu0 0.0
        %381 = vmatprep.subr.mxu0 0.0
        %382 = vmatpush2.msra.mxu0 0.0
        %383 = vmatprep.subr.mxu0 0.0
        %384 = vmatpush2.msra.mxu0 0.0
        %385 = vmatprep.subr.mxu0 0.0
        %386 = vmatpush2.msra.mxu0 0.0
        %387 = vmatprep.subr.mxu0 0.0
        %388 = vmatpush2.msra.mxu0 0.0
        %389 = vmatprep.subr.mxu0 0.0
        %390 = vmatpush2.msra.mxu0 0.0
        %391 = vmatprep.subr.mxu0 0.0
        %392 = vmatpush2.msra.mxu0 0.0
        %393 = vmatprep.subr.mxu0 0.0
        %394 = vmatpush2.msra.mxu0 0.0
        %395 = vmatprep.subr.mxu0 0.0
        %396 = vmatpush2.msra.mxu0 0.0
        %397 = vmatprep.subr.mxu0 0.0
        %398 = vmatpush2.msra.mxu0 0.0
        %399 = vmatprep.subr.mxu0 0.0
        %400 = vmatpush2.msra.mxu0 0.0
        %401 = vmatprep.subr.mxu0 0.0
        %402 = vmatpush2.msra.mxu0 0.0
        %403 = vmatprep.subr.mxu0 0.0
        %404 = vmatpush2.msra.mxu0 0.0
        %405 = vmatprep.subr.mxu0 0.0
        %406 = vmatpush2.msra.mxu0 0.0
        %407 = vmatprep.mubr.f32.mxu0 0.0
        %408 = vmatmul.mubr.f32.gmra.mxu0 %v338
        %v409 = vpop.f32.mrf.mxu0
        %v410 = vadd.f32 0.0, %v409
        %v411 = vpop.f32.mrf.mxu0
        %412 = vmatprep.mubr.f32.mxu0 0.0
        %413 = vmatmul.mubr.f32.gmra.mxu0 %v341
        %v414 = vpop.f32.mrf.mxu0
        %v415 = vadd.f32 0.0, %v414
        %v416 = vpop.f32.mrf.mxu0
        %417 = vdwg.mxu0
        %v419 = vsel %vm309, %v316, 0
        %v422 = vsel %vm309, %v317, 0
        %424 = vmatprep.subr.mxu0 0.0
        %425 = vmatpush1.msra.mxu0 0.0
        %426 = vmatprep.subr.mxu0 0.0
        %427 = vmatpush1.msra.mxu0 0.0
        %428 = vmatprep.subr.mxu0 0.0
        %429 = vmatpush1.msra.mxu0 0.0
        %430 = vmatprep.subr.mxu0 0.0
        %431 = vmatpush1.msra.mxu0 0.0
        %432 = vmatprep.subr.mxu0 0.0
        %433 = vmatpush1.msra.mxu0 0.0
        %434 = vmatprep.subr.mxu0 0.0
        %435 = vmatpush1.msra.mxu0 0.0
        %436 = vmatprep.subr.mxu0 0.0
        %437 = vmatpush1.msra.mxu0 0.0
        %438 = vmatprep.subr.mxu0 0.0
        %439 = vmatpush1.msra.mxu0 0.0
        %440 = vmatprep.subr.mxu0 0.0
        %441 = vmatpush1.msra.mxu0 %v325
        %442 = vmatprep.subr.mxu0 0.0
        %443 = vmatpush1.msra.mxu0 %v324
        %444 = vmatprep.subr.mxu0 0.0
        %445 = vmatpush1.msra.mxu0 %v323
        %446 = vmatprep.subr.mxu0 0.0
        %447 = vmatpush1.msra.mxu0 %v322
        %448 = vmatprep.subr.mxu0 0.0
        %449 = vmatpush1.msra.mxu0 %v321
        %450 = vmatprep.subr.mxu0 0.0
        %451 = vmatpush1.msra.mxu0 %v320
        %452 = vmatprep.subr.mxu0 0.0
        %453 = vmatpush1.msra.mxu0 %v319
        %454 = vmatprep.subr.mxu0 0.0
        %455 = vmatpush1.msra.mxu0 %v318
        %456 = vmatprep.subr.mxu0 0.0
        %457 = vmatpush2.msra.mxu0 0.0
        %458 = vmatprep.subr.mxu0 0.0
        %459 = vmatpush2.msra.mxu0 0.0
        %460 = vmatprep.subr.mxu0 0.0
        %461 = vmatpush2.msra.mxu0 0.0
        %462 = vmatprep.subr.mxu0 0.0
        %463 = vmatpush2.msra.mxu0 0.0
        %464 = vmatprep.subr.mxu0 0.0
        %465 = vmatpush2.msra.mxu0 0.0
        %466 = vmatprep.subr.mxu0 0.0
        %467 = vmatpush2.msra.mxu0 0.0
        %468 = vmatprep.subr.mxu0 0.0
        %469 = vmatpush2.msra.mxu0 0.0
        %470 = vmatprep.subr.mxu0 0.0
        %471 = vmatpush2.msra.mxu0 0.0
        %472 = vmatprep.subr.mxu0 0.0
        %473 = vmatpush2.msra.mxu0 0.0
        %474 = vmatprep.subr.mxu0 0.0
        %475 = vmatpush2.msra.mxu0 0.0
        %476 = vmatprep.subr.mxu0 0.0
        %477 = vmatpush2.msra.mxu0 0.0
        %478 = vmatprep.subr.mxu0 0.0
        %479 = vmatpush2.msra.mxu0 0.0
        %480 = vmatprep.subr.mxu0 0.0
        %481 = vmatpush2.msra.mxu0 0.0
        %482 = vmatprep.subr.mxu0 0.0
        %483 = vmatpush2.msra.mxu0 0.0
        %484 = vmatprep.subr.mxu0 0.0
        %485 = vmatpush2.msra.mxu0 0.0
        %486 = vmatprep.subr.mxu0 0.0
        %487 = vmatpush2.msra.mxu0 0.0
        %488 = vmatprep.mubr.f32.mxu0 0.0
        %489 = vmatmul.mubr.f32.gmra.mxu0 %v419
        %v490 = vpop.f32.mrf.mxu0
        %v491 = vadd.f32 %v410, %v490
        %v492 = vpop.f32.mrf.mxu0
        %493 = vmatprep.mubr.f32.mxu0 0.0
        %494 = vmatmul.mubr.f32.gmra.mxu0 %v422
        %v495 = vpop.f32.mrf.mxu0
        %v496 = vadd.f32 %v415, %v495
        %v497 = vpop.f32.mrf.mxu0
        %498 = vdwg.mxu0
        %v499 = vld [vmem:[#allocation2 + $0x7] sm:$0xff]
        %v500 = vld [vmem:[#allocation2 + $0xf] sm:$0xff]
        %s501 = scalar_lea.vmem [#allocation4], 128
        %v502 = vld [vmem:[%s501] sm:$0xff]
        %v503 = vld [vmem:[%s501 + $0x8] sm:$0xff]
        %v504 = vld [vmem:[%s501 + $0x10] sm:$0xff]
        %v505 = vld [vmem:[%s501 + $0x18] sm:$0xff]
        %v506 = vld [vmem:[%s501 + $0x20] sm:$0xff]
        %v507 = vld [vmem:[%s501 + $0x28] sm:$0xff]
        %v508 = vld [vmem:[%s501 + $0x30] sm:$0xff]
        %v509 = vld [vmem:[%s501 + $0x38] sm:$0xff]
        %v511 = vsel %vm309, %v499, 0
        %v514 = vsel %vm309, %v500, 0
        %516 = vmatprep.subr.mxu0 0.0
        %517 = vmatpush1.msra.mxu0 0.0
        %518 = vmatprep.subr.mxu0 0.0
        %519 = vmatpush1.msra.mxu0 0.0
        %520 = vmatprep.subr.mxu0 0.0
        %521 = vmatpush1.msra.mxu0 0.0
        %522 = vmatprep.subr.mxu0 0.0
        %523 = vmatpush1.msra.mxu0 0.0
        %524 = vmatprep.subr.mxu0 0.0
        %525 = vmatpush1.msra.mxu0 0.0
        %526 = vmatprep.subr.mxu0 0.0
        %527 = vmatpush1.msra.mxu0 0.0
        %528 = vmatprep.subr.mxu0 0.0
        %529 = vmatpush1.msra.mxu0 0.0
        %530 = vmatprep.subr.mxu0 0.0
        %531 = vmatpush1.msra.mxu0 0.0
        %532 = vmatprep.subr.mxu0 0.0
        %533 = vmatpush1.msra.mxu0 %v509
        %534 = vmatprep.subr.mxu0 0.0
        %535 = vmatpush1.msra.mxu0 %v508
        %536 = vmatprep.subr.mxu0 0.0
        %537 = vmatpush1.msra.mxu0 %v507
        %538 = vmatprep.subr.mxu0 0.0
        %539 = vmatpush1.msra.mxu0 %v506
        %540 = vmatprep.subr.mxu0 0.0
        %541 = vmatpush1.msra.mxu0 %v505
        %542 = vmatprep.subr.mxu0 0.0
        %543 = vmatpush1.msra.mxu0 %v504
        %544 = vmatprep.subr.mxu0 0.0
        %545 = vmatpush1.msra.mxu0 %v503
        %546 = vmatprep.subr.mxu0 0.0
        %547 = vmatpush1.msra.mxu0 %v502
        %548 = vmatprep.subr.mxu0 0.0
        %549 = vmatpush2.msra.mxu0 0.0
        %550 = vmatprep.subr.mxu0 0.0
        %551 = vmatpush2.msra.mxu0 0.0
        %552 = vmatprep.subr.mxu0 0.0
        %553 = vmatpush2.msra.mxu0 0.0
        %554 = vmatprep.subr.mxu0 0.0
        %555 = vmatpush2.msra.mxu0 0.0
        %556 = vmatprep.subr.mxu0 0.0
        %557 = vmatpush2.msra.mxu0 0.0
        %558 = vmatprep.subr.mxu0 0.0
        %559 = vmatpush2.msra.mxu0 0.0
        %560 = vmatprep.subr.mxu0 0.0
        %561 = vmatpush2.msra.mxu0 0.0
        %562 = vmatprep.subr.mxu0 0.0
        %563 = vmatpush2.msra.mxu0 0.0
        %564 = vmatprep.subr.mxu0 0.0
        %565 = vmatpush2.msra.mxu0 0.0
        %566 = vmatprep.subr.mxu0 0.0
        %567 = vmatpush2.msra.mxu0 0.0
        %568 = vmatprep.subr.mxu0 0.0
        %569 = vmatpush2.msra.mxu0 0.0
        %570 = vmatprep.subr.mxu0 0.0
        %571 = vmatpush2.msra.mxu0 0.0
        %572 = vmatprep.subr.mxu0 0.0
        %573 = vmatpush2.msra.mxu0 0.0
        %574 = vmatprep.subr.mxu0 0.0
        %575 = vmatpush2.msra.mxu0 0.0
        %576 = vmatprep.subr.mxu0 0.0
        %577 = vmatpush2.msra.mxu0 0.0
        %578 = vmatprep.subr.mxu0 0.0
        %579 = vmatpush2.msra.mxu0 0.0
        %580 = vmatprep.mubr.f32.mxu0 0.0
        %581 = vmatmul.mubr.f32.gmra.mxu0 %v511
        %v582 = vpop.f32.mrf.mxu0
        %v583 = vadd.f32 0.0, %v582
        %v584 = vpop.f32.mrf.mxu0
        %585 = vmatprep.mubr.f32.mxu0 0.0
        %586 = vmatmul.mubr.f32.gmra.mxu0 %v514
        %v587 = vpop.f32.mrf.mxu0
        %v588 = vadd.f32 0.0, %v587
        %v589 = vpop.f32.mrf.mxu0
        %590 = vdwg.mxu0
        %v591 = vadd.f32 %v491, %v583
        %v592 = vadd.f32 %v496, %v588
        %v593 = vld [vmem:[#allocation2 + $0x8] sm:$0xff]
        %v594 = vld [vmem:[#allocation2 + $0x10] sm:$0xff]
        %s595 = scalar_lea.vmem [#allocation4], 192
        %v596 = vld [vmem:[%s595] sm:$0xff]
        %v597 = vld [vmem:[%s595 + $0x8] sm:$0xff]
        %v598 = vld [vmem:[%s595 + $0x10] sm:$0xff]
        %v599 = vld [vmem:[%s595 + $0x18] sm:$0xff]
        %v600 = vld [vmem:[%s595 + $0x20] sm:$0xff]
        %v601 = vld [vmem:[%s595 + $0x28] sm:$0xff]
        %v602 = vld [vmem:[%s595 + $0x30] sm:$0xff]
        %v603 = vld [vmem:[%s595 + $0x38] sm:$0xff]
        %v605 = vsel %vm309, %v593, 0
        %v608 = vsel %vm309, %v594, 0
        %610 = vmatprep.subr.mxu0 0.0
        %611 = vmatpush1.msra.mxu0 0.0
        %612 = vmatprep.subr.mxu0 0.0
        %613 = vmatpush1.msra.mxu0 0.0
        %614 = vmatprep.subr.mxu0 0.0
        %615 = vmatpush1.msra.mxu0 0.0
        %616 = vmatprep.subr.mxu0 0.0
        %617 = vmatpush1.msra.mxu0 0.0
        %618 = vmatprep.subr.mxu0 0.0
        %619 = vmatpush1.msra.mxu0 0.0
        %620 = vmatprep.subr.mxu0 0.0
        %621 = vmatpush1.msra.mxu0 0.0
        %622 = vmatprep.subr.mxu0 0.0
        %623 = vmatpush1.msra.mxu0 0.0
        %624 = vmatprep.subr.mxu0 0.0
        %625 = vmatpush1.msra.mxu0 0.0
        %626 = vmatprep.subr.mxu0 0.0
        %627 = vmatpush1.msra.mxu0 %v603
        %628 = vmatprep.subr.mxu0 0.0
        %629 = vmatpush1.msra.mxu0 %v602
        %630 = vmatprep.subr.mxu0 0.0
        %631 = vmatpush1.msra.mxu0 %v601
        %632 = vmatprep.subr.mxu0 0.0
        %633 = vmatpush1.msra.mxu0 %v600
        %634 = vmatprep.subr.mxu0 0.0
        %635 = vmatpush1.msra.mxu0 %v599
        %636 = vmatprep.subr.mxu0 0.0
        %637 = vmatpush1.msra.mxu0 %v598
        %638 = vmatprep.subr.mxu0 0.0
        %639 = vmatpush1.msra.mxu0 %v597
        %640 = vmatprep.subr.mxu0 0.0
        %641 = vmatpush1.msra.mxu0 %v596
        %642 = vmatprep.subr.mxu0 0.0
        %643 = vmatpush2.msra.mxu0 0.0
        %644 = vmatprep.subr.mxu0 0.0
        %645 = vmatpush2.msra.mxu0 0.0
        %646 = vmatprep.subr.mxu0 0.0
        %647 = vmatpush2.msra.mxu0 0.0
        %648 = vmatprep.subr.mxu0 0.0
        %649 = vmatpush2.msra.mxu0 0.0
        %650 = vmatprep.subr.mxu0 0.0
        %651 = vmatpush2.msra.mxu0 0.0
        %652 = vmatprep.subr.mxu0 0.0
        %653 = vmatpush2.msra.mxu0 0.0
        %654 = vmatprep.subr.mxu0 0.0
        %655 = vmatpush2.msra.mxu0 0.0
        %656 = vmatprep.subr.mxu0 0.0
        %657 = vmatpush2.msra.mxu0 0.0
        %658 = vmatprep.subr.mxu0 0.0
        %659 = vmatpush2.msra.mxu0 0.0
        %660 = vmatprep.subr.mxu0 0.0
        %661 = vmatpush2.msra.mxu0 0.0
        %662 = vmatprep.subr.mxu0 0.0
        %663 = vmatpush2.msra.mxu0 0.0
        %664 = vmatprep.subr.mxu0 0.0
        %665 = vmatpush2.msra.mxu0 0.0
        %666 = vmatprep.subr.mxu0 0.0
        %667 = vmatpush2.msra.mxu0 0.0
        %668 = vmatprep.subr.mxu0 0.0
        %669 = vmatpush2.msra.mxu0 0.0
        %670 = vmatprep.subr.mxu0 0.0
        %671 = vmatpush2.msra.mxu0 0.0
        %672 = vmatprep.subr.mxu0 0.0
        %673 = vmatpush2.msra.mxu0 0.0
        %674 = vmatprep.mubr.f32.mxu0 0.0
        %675 = vmatmul.mubr.f32.gmra.mxu0 %v605
        %v676 = vpop.f32.mrf.mxu0
        %v677 = vadd.f32 0.0, %v676
        %v678 = vpop.f32.mrf.mxu0
        %679 = vmatprep.mubr.f32.mxu0 0.0
        %680 = vmatmul.mubr.f32.gmra.mxu0 %v608
        %v681 = vpop.f32.mrf.mxu0
        %v682 = vadd.f32 0.0, %v681
        %v683 = vpop.f32.mrf.mxu0
        %684 = vdwg.mxu0
        %v685 = vadd.f32 %v591, %v677
        %v686 = vadd.f32 %v592, %v682
        %v687 = vld [vmem:[#allocation2 + $0x9] sm:$0xff]
        %v688 = vld [vmem:[#allocation2 + $0x11] sm:$0xff]
        %s689 = scalar_lea.vmem [#allocation4], 256
        %v690 = vld [vmem:[%s689] sm:$0xff]
        %v691 = vld [vmem:[%s689 + $0x8] sm:$0xff]
        %v692 = vld [vmem:[%s689 + $0x10] sm:$0xff]
        %v693 = vld [vmem:[%s689 + $0x18] sm:$0xff]
        %v694 = vld [vmem:[%s689 + $0x20] sm:$0xff]
        %v695 = vld [vmem:[%s689 + $0x28] sm:$0xff]
        %v696 = vld [vmem:[%s689 + $0x30] sm:$0xff]
        %v697 = vld [vmem:[%s689 + $0x38] sm:$0xff]
        %v699 = vsel %vm309, %v687, 0
        %v702 = vsel %vm309, %v688, 0
        %704 = vmatprep.subr.mxu0 0.0
        %705 = vmatpush1.msra.mxu0 0.0
        %706 = vmatprep.subr.mxu0 0.0
        %707 = vmatpush1.msra.mxu0 0.0
        %708 = vmatprep.subr.mxu0 0.0
        %709 = vmatpush1.msra.mxu0 0.0
        %710 = vmatprep.subr.mxu0 0.0
        %711 = vmatpush1.msra.mxu0 0.0
        %712 = vmatprep.subr.mxu0 0.0
        %713 = vmatpush1.msra.mxu0 0.0
        %714 = vmatprep.subr.mxu0 0.0
        %715 = vmatpush1.msra.mxu0 0.0
        %716 = vmatprep.subr.mxu0 0.0
        %717 = vmatpush1.msra.mxu0 0.0
        %718 = vmatprep.subr.mxu0 0.0
        %719 = vmatpush1.msra.mxu0 0.0
        %720 = vmatprep.subr.mxu0 0.0
        %721 = vmatpush1.msra.mxu0 %v697
        %722 = vmatprep.subr.mxu0 0.0
        %723 = vmatpush1.msra.mxu0 %v696
        %724 = vmatprep.subr.mxu0 0.0
        %725 = vmatpush1.msra.mxu0 %v695
        %726 = vmatprep.subr.mxu0 0.0
        %727 = vmatpush1.msra.mxu0 %v694
        %728 = vmatprep.subr.mxu0 0.0
        %729 = vmatpush1.msra.mxu0 %v693
        %730 = vmatprep.subr.mxu0 0.0
        %731 = vmatpush1.msra.mxu0 %v692
        %732 = vmatprep.subr.mxu0 0.0
        %733 = vmatpush1.msra.mxu0 %v691
        %734 = vmatprep.subr.mxu0 0.0
        %735 = vmatpush1.msra.mxu0 %v690
        %736 = vmatprep.subr.mxu0 0.0
        %737 = vmatpush2.msra.mxu0 0.0
        %738 = vmatprep.subr.mxu0 0.0
        %739 = vmatpush2.msra.mxu0 0.0
        %740 = vmatprep.subr.mxu0 0.0
        %741 = vmatpush2.msra.mxu0 0.0
        %742 = vmatprep.subr.mxu0 0.0
        %743 = vmatpush2.msra.mxu0 0.0
        %744 = vmatprep.subr.mxu0 0.0
        %745 = vmatpush2.msra.mxu0 0.0
        %746 = vmatprep.subr.mxu0 0.0
        %747 = vmatpush2.msra.mxu0 0.0
        %748 = vmatprep.subr.mxu0 0.0
        %749 = vmatpush2.msra.mxu0 0.0
        %750 = vmatprep.subr.mxu0 0.0
        %751 = vmatpush2.msra.mxu0 0.0
        %752 = vmatprep.subr.mxu0 0.0
        %753 = vmatpush2.msra.mxu0 0.0
        %754 = vmatprep.subr.mxu0 0.0
        %755 = vmatpush2.msra.mxu0 0.0
        %756 = vmatprep.subr.mxu0 0.0
        %757 = vmatpush2.msra.mxu0 0.0
        %758 = vmatprep.subr.mxu0 0.0
        %759 = vmatpush2.msra.mxu0 0.0
        %760 = vmatprep.subr.mxu0 0.0
        %761 = vmatpush2.msra.mxu0 0.0
        %762 = vmatprep.subr.mxu0 0.0
        %763 = vmatpush2.msra.mxu0 0.0
        %764 = vmatprep.subr.mxu0 0.0
        %765 = vmatpush2.msra.mxu0 0.0
        %766 = vmatprep.subr.mxu0 0.0
        %767 = vmatpush2.msra.mxu0 0.0
        %768 = vmatprep.mubr.f32.mxu0 0.0
        %769 = vmatmul.mubr.f32.gmra.mxu0 %v699
        %v770 = vpop.f32.mrf.mxu0
        %v771 = vadd.f32 0.0, %v770
        %v772 = vpop.f32.mrf.mxu0
        %773 = vmatprep.mubr.f32.mxu0 0.0
        %774 = vmatmul.mubr.f32.gmra.mxu0 %v702
        %v775 = vpop.f32.mrf.mxu0
        %v776 = vadd.f32 0.0, %v775
        %v777 = vpop.f32.mrf.mxu0
        %778 = vdwg.mxu0
        %v779 = vadd.f32 %v685, %v771
        %v780 = vadd.f32 %v686, %v776
        %v781 = vld [vmem:[#allocation2 + $0xa] sm:$0xff]
        %v782 = vld [vmem:[#allocation2 + $0x12] sm:$0xff]
        %s783 = scalar_lea.vmem [#allocation4], 320
        %v784 = vld [vmem:[%s783] sm:$0xff]
        %v785 = vld [vmem:[%s783 + $0x8] sm:$0xff]
        %v786 = vld [vmem:[%s783 + $0x10] sm:$0xff]
        %v787 = vld [vmem:[%s783 + $0x18] sm:$0xff]
        %v788 = vld [vmem:[%s783 + $0x20] sm:$0xff]
        %v789 = vld [vmem:[%s783 + $0x28] sm:$0xff]
        %v790 = vld [vmem:[%s783 + $0x30] sm:$0xff]
        %v791 = vld [vmem:[%s783 + $0x38] sm:$0xff]
        %v793 = vsel %vm309, %v781, 0
        %v796 = vsel %vm309, %v782, 0
        %798 = vmatprep.subr.mxu0 0.0
        %799 = vmatpush1.msra.mxu0 0.0
        %800 = vmatprep.subr.mxu0 0.0
        %801 = vmatpush1.msra.mxu0 0.0
        %802 = vmatprep.subr.mxu0 0.0
        %803 = vmatpush1.msra.mxu0 0.0
        %804 = vmatprep.subr.mxu0 0.0
        %805 = vmatpush1.msra.mxu0 0.0
        %806 = vmatprep.subr.mxu0 0.0
        %807 = vmatpush1.msra.mxu0 0.0
        %808 = vmatprep.subr.mxu0 0.0
        %809 = vmatpush1.msra.mxu0 0.0
        %810 = vmatprep.subr.mxu0 0.0
        %811 = vmatpush1.msra.mxu0 0.0
        %812 = vmatprep.subr.mxu0 0.0
        %813 = vmatpush1.msra.mxu0 0.0
        %814 = vmatprep.subr.mxu0 0.0
        %815 = vmatpush1.msra.mxu0 %v791
        %816 = vmatprep.subr.mxu0 0.0
        %817 = vmatpush1.msra.mxu0 %v790
        %818 = vmatprep.subr.mxu0 0.0
        %819 = vmatpush1.msra.mxu0 %v789
        %820 = vmatprep.subr.mxu0 0.0
        %821 = vmatpush1.msra.mxu0 %v788
        %822 = vmatprep.subr.mxu0 0.0
        %823 = vmatpush1.msra.mxu0 %v787
        %824 = vmatprep.subr.mxu0 0.0
        %825 = vmatpush1.msra.mxu0 %v786
        %826 = vmatprep.subr.mxu0 0.0
        %827 = vmatpush1.msra.mxu0 %v785
        %828 = vmatprep.subr.mxu0 0.0
        %829 = vmatpush1.msra.mxu0 %v784
        %830 = vmatprep.subr.mxu0 0.0
        %831 = vmatpush2.msra.mxu0 0.0
        %832 = vmatprep.subr.mxu0 0.0
        %833 = vmatpush2.msra.mxu0 0.0
        %834 = vmatprep.subr.mxu0 0.0
        %835 = vmatpush2.msra.mxu0 0.0
        %836 = vmatprep.subr.mxu0 0.0
        %837 = vmatpush2.msra.mxu0 0.0
        %838 = vmatprep.subr.mxu0 0.0
        %839 = vmatpush2.msra.mxu0 0.0
        %840 = vmatprep.subr.mxu0 0.0
        %841 = vmatpush2.msra.mxu0 0.0
        %842 = vmatprep.subr.mxu0 0.0
        %843 = vmatpush2.msra.mxu0 0.0
        %844 = vmatprep.subr.mxu0 0.0
        %845 = vmatpush2.msra.mxu0 0.0
        %846 = vmatprep.subr.mxu0 0.0
        %847 = vmatpush2.msra.mxu0 0.0
        %848 = vmatprep.subr.mxu0 0.0
        %849 = vmatpush2.msra.mxu0 0.0
        %850 = vmatprep.subr.mxu0 0.0
        %851 = vmatpush2.msra.mxu0 0.0
        %852 = vmatprep.subr.mxu0 0.0
        %853 = vmatpush2.msra.mxu0 0.0
        %854 = vmatprep.subr.mxu0 0.0
        %855 = vmatpush2.msra.mxu0 0.0
        %856 = vmatprep.subr.mxu0 0.0
        %857 = vmatpush2.msra.mxu0 0.0
        %858 = vmatprep.subr.mxu0 0.0
        %859 = vmatpush2.msra.mxu0 0.0
        %860 = vmatprep.subr.mxu0 0.0
        %861 = vmatpush2.msra.mxu0 0.0
        %862 = vmatprep.mubr.f32.mxu0 0.0
        %863 = vmatmul.mubr.f32.gmra.mxu0 %v793
        %v864 = vpop.f32.mrf.mxu0
        %v865 = vadd.f32 0.0, %v864
        %v866 = vpop.f32.mrf.mxu0
        %867 = vmatprep.mubr.f32.mxu0 0.0
        %868 = vmatmul.mubr.f32.gmra.mxu0 %v796
        %v869 = vpop.f32.mrf.mxu0
        %v870 = vadd.f32 0.0, %v869
        %v871 = vpop.f32.mrf.mxu0
        %872 = vdwg.mxu0
        %v873 = vadd.f32 %v779, %v865
        %v874 = vadd.f32 %v780, %v870
        %v875 = vld [vmem:[#allocation2 + $0xb] sm:$0xff]
        %v876 = vld [vmem:[#allocation2 + $0x13] sm:$0xff]
        %s877 = scalar_lea.vmem [#allocation4], 384
        %v878 = vld [vmem:[%s877] sm:$0xff]
        %v879 = vld [vmem:[%s877 + $0x8] sm:$0xff]
        %v880 = vld [vmem:[%s877 + $0x10] sm:$0xff]
        %v881 = vld [vmem:[%s877 + $0x18] sm:$0xff]
        %v882 = vld [vmem:[%s877 + $0x20] sm:$0xff]
        %v883 = vld [vmem:[%s877 + $0x28] sm:$0xff]
        %v884 = vld [vmem:[%s877 + $0x30] sm:$0xff]
        %v885 = vld [vmem:[%s877 + $0x38] sm:$0xff]
        %v887 = vsel %vm309, %v875, 0
        %v890 = vsel %vm309, %v876, 0
        %892 = vmatprep.subr.mxu0 0.0
        %893 = vmatpush1.msra.mxu0 0.0
        %894 = vmatprep.subr.mxu0 0.0
        %895 = vmatpush1.msra.mxu0 0.0
        %896 = vmatprep.subr.mxu0 0.0
        %897 = vmatpush1.msra.mxu0 0.0
        %898 = vmatprep.subr.mxu0 0.0
        %899 = vmatpush1.msra.mxu0 0.0
        %900 = vmatprep.subr.mxu0 0.0
        %901 = vmatpush1.msra.mxu0 0.0
        %902 = vmatprep.subr.mxu0 0.0
        %903 = vmatpush1.msra.mxu0 0.0
        %904 = vmatprep.subr.mxu0 0.0
        %905 = vmatpush1.msra.mxu0 0.0
        %906 = vmatprep.subr.mxu0 0.0
        %907 = vmatpush1.msra.mxu0 0.0
        %908 = vmatprep.subr.mxu0 0.0
        %909 = vmatpush1.msra.mxu0 %v885
        %910 = vmatprep.subr.mxu0 0.0
        %911 = vmatpush1.msra.mxu0 %v884
        %912 = vmatprep.subr.mxu0 0.0
        %913 = vmatpush1.msra.mxu0 %v883
        %914 = vmatprep.subr.mxu0 0.0
        %915 = vmatpush1.msra.mxu0 %v882
        %916 = vmatprep.subr.mxu0 0.0
        %917 = vmatpush1.msra.mxu0 %v881
        %918 = vmatprep.subr.mxu0 0.0
        %919 = vmatpush1.msra.mxu0 %v880
        %920 = vmatprep.subr.mxu0 0.0
        %921 = vmatpush1.msra.mxu0 %v879
        %922 = vmatprep.subr.mxu0 0.0
        %923 = vmatpush1.msra.mxu0 %v878
        %924 = vmatprep.subr.mxu0 0.0
        %925 = vmatpush2.msra.mxu0 0.0
        %926 = vmatprep.subr.mxu0 0.0
        %927 = vmatpush2.msra.mxu0 0.0
        %928 = vmatprep.subr.mxu0 0.0
        %929 = vmatpush2.msra.mxu0 0.0
        %930 = vmatprep.subr.mxu0 0.0
        %931 = vmatpush2.msra.mxu0 0.0
        %932 = vmatprep.subr.mxu0 0.0
        %933 = vmatpush2.msra.mxu0 0.0
        %934 = vmatprep.subr.mxu0 0.0
        %935 = vmatpush2.msra.mxu0 0.0
        %936 = vmatprep.subr.mxu0 0.0
        %937 = vmatpush2.msra.mxu0 0.0
        %938 = vmatprep.subr.mxu0 0.0
        %939 = vmatpush2.msra.mxu0 0.0
        %940 = vmatprep.subr.mxu0 0.0
        %941 = vmatpush2.msra.mxu0 0.0
        %942 = vmatprep.subr.mxu0 0.0
        %943 = vmatpush2.msra.mxu0 0.0
        %944 = vmatprep.subr.mxu0 0.0
        %945 = vmatpush2.msra.mxu0 0.0
        %946 = vmatprep.subr.mxu0 0.0
        %947 = vmatpush2.msra.mxu0 0.0
        %948 = vmatprep.subr.mxu0 0.0
        %949 = vmatpush2.msra.mxu0 0.0
        %950 = vmatprep.subr.mxu0 0.0
        %951 = vmatpush2.msra.mxu0 0.0
        %952 = vmatprep.subr.mxu0 0.0
        %953 = vmatpush2.msra.mxu0 0.0
        %954 = vmatprep.subr.mxu0 0.0
        %955 = vmatpush2.msra.mxu0 0.0
        %956 = vmatprep.mubr.f32.mxu0 0.0
        %957 = vmatmul.mubr.f32.gmra.mxu0 %v887
        %v958 = vpop.f32.mrf.mxu0
        %v959 = vadd.f32 0.0, %v958
        %v960 = vpop.f32.mrf.mxu0
        %961 = vmatprep.mubr.f32.mxu0 0.0
        %962 = vmatmul.mubr.f32.gmra.mxu0 %v890
        %v963 = vpop.f32.mrf.mxu0
        %v964 = vadd.f32 0.0, %v963
        %v965 = vpop.f32.mrf.mxu0
        %966 = vdwg.mxu0
        %v967 = vadd.f32 %v873, %v959
        %v968 = vadd.f32 %v874, %v964
        %v969 = vld [vmem:[%s2] sm:$0x1]
        %v971 = vlaneseq
        %v972 = vshrl.u32 %v971, 7
        %v973 = vsub.s32 0, %v972
        %v974 = vrot.slane %v969, %v973
        %v976 = vadd.f32 %v967, %v974
        %v977 = vadd.f32 %v968, %v974
        %978 = vst [vmem:[#allocation3] sm:$0xff] 0.0
        %979 = vst [vmem:[#allocation3 + $0x8] sm:$0xff] 0.0
        %980 = vst [vmem:[#allocation3 + $0x10] sm:$0xff] 0.0
        %981 = vst [vmem:[#allocation3 + $0x18] sm:$0xff] 0.0
        %982 = vst [vmem:[#allocation3 + $0x8] sm:$0xff] %v976
        %983 = vst [vmem:[#allocation3 + $0x10] sm:$0xff] %v977
        %v984 = vld [vmem:[#allocation3 + $0x5] sm:$0xff]
        %v985 = vld [vmem:[#allocation3 + $0xd] sm:$0xff]
        %v986 = vld [vmem:[#allocation7] sm:$0xff]
        %v987 = vld [vmem:[#allocation7 + $0x8] sm:$0xff]
        %v988 = vld [vmem:[#allocation7 + $0x10] sm:$0xff]
        %v989 = vld [vmem:[#allocation7 + $0x18] sm:$0xff]
        %v990 = vld [vmem:[#allocation7 + $0x20] sm:$0xff]
        %v991 = vld [vmem:[#allocation7 + $0x28] sm:$0xff]
        %v992 = vld [vmem:[#allocation7 + $0x30] sm:$0xff]
        %v993 = vld [vmem:[#allocation7 + $0x38] sm:$0xff]
        %v994 = vld [vmem:[#allocation7 + $0x40] sm:$0xff]
        %v995 = vld [vmem:[#allocation7 + $0x48] sm:$0xff]
        %v996 = vld [vmem:[#allocation7 + $0x50] sm:$0xff]
        %v997 = vld [vmem:[#allocation7 + $0x58] sm:$0xff]
        %v998 = vld [vmem:[#allocation7 + $0x60] sm:$0xff]
        %v999 = vld [vmem:[#allocation7 + $0x68] sm:$0xff]
        %v1000 = vld [vmem:[#allocation7 + $0x70] sm:$0xff]
        %v1001 = vld [vmem:[#allocation7 + $0x78] sm:$0xff]
        %v1002 = vld [vmem:[#allocation3 + $0x6] sm:$0xff]
        %v1003 = vld [vmem:[#allocation3 + $0xe] sm:$0xff]
        %s1004 = scalar_lea.vmem [#allocation7], 128
        %v1005 = vld [vmem:[%s1004] sm:$0xff]
        %v1006 = vld [vmem:[%s1004 + $0x8] sm:$0xff]
        %v1007 = vld [vmem:[%s1004 + $0x10] sm:$0xff]
        %v1008 = vld [vmem:[%s1004 + $0x18] sm:$0xff]
        %v1009 = vld [vmem:[%s1004 + $0x20] sm:$0xff]
        %v1010 = vld [vmem:[%s1004 + $0x28] sm:$0xff]
        %v1011 = vld [vmem:[%s1004 + $0x30] sm:$0xff]
        %v1012 = vld [vmem:[%s1004 + $0x38] sm:$0xff]
        %v1013 = vld [vmem:[%s1004 + $0x40] sm:$0xff]
        %v1014 = vld [vmem:[%s1004 + $0x48] sm:$0xff]
        %v1015 = vld [vmem:[%s1004 + $0x50] sm:$0xff]
        %v1016 = vld [vmem:[%s1004 + $0x58] sm:$0xff]
        %v1017 = vld [vmem:[%s1004 + $0x60] sm:$0xff]
        %v1018 = vld [vmem:[%s1004 + $0x68] sm:$0xff]
        %v1019 = vld [vmem:[%s1004 + $0x70] sm:$0xff]
        %v1020 = vld [vmem:[%s1004 + $0x78] sm:$0xff]
        %1021 = vmatprep.subr.mxu0 0.0
        %1022 = vmatpush1.msra.mxu0 %v1020
        %1023 = vmatprep.subr.mxu0 0.0
        %1024 = vmatpush1.msra.mxu0 %v1019
        %1025 = vmatprep.subr.mxu0 0.0
        %1026 = vmatpush1.msra.mxu0 %v1018
        %1027 = vmatprep.subr.mxu0 0.0
        %1028 = vmatpush1.msra.mxu0 %v1017
        %1029 = vmatprep.subr.mxu0 0.0
        %1030 = vmatpush1.msra.mxu0 %v1016
        %1031 = vmatprep.subr.mxu0 0.0
        %1032 = vmatpush1.msra.mxu0 %v1015
        %1033 = vmatprep.subr.mxu0 0.0
        %1034 = vmatpush1.msra.mxu0 %v1014
        %1035 = vmatprep.subr.mxu0 0.0
        %1036 = vmatpush1.msra.mxu0 %v1013
        %1037 = vmatprep.subr.mxu0 0.0
        %1038 = vmatpush1.msra.mxu0 %v1012
        %1039 = vmatprep.subr.mxu0 0.0
        %1040 = vmatpush1.msra.mxu0 %v1011
        %1041 = vmatprep.subr.mxu0 0.0
        %1042 = vmatpush1.msra.mxu0 %v1010
        %1043 = vmatprep.subr.mxu0 0.0
        %1044 = vmatpush1.msra.mxu0 %v1009
        %1045 = vmatprep.subr.mxu0 0.0
        %1046 = vmatpush1.msra.mxu0 %v1008
        %1047 = vmatprep.subr.mxu0 0.0
        %1048 = vmatpush1.msra.mxu0 %v1007
        %1049 = vmatprep.subr.mxu0 0.0
        %1050 = vmatpush1.msra.mxu0 %v1006
        %1051 = vmatprep.subr.mxu0 0.0
        %1052 = vmatpush1.msra.mxu0 %v1005
        %1053 = vmatprep.subr.mxu0 0.0
        %1054 = vmatpush2.msra.mxu0 0.0
        %1055 = vmatprep.subr.mxu0 0.0
        %1056 = vmatpush2.msra.mxu0 0.0
        %1057 = vmatprep.subr.mxu0 0.0
        %1058 = vmatpush2.msra.mxu0 0.0
        %1059 = vmatprep.subr.mxu0 0.0
        %1060 = vmatpush2.msra.mxu0 0.0
        %1061 = vmatprep.subr.mxu0 0.0
        %1062 = vmatpush2.msra.mxu0 0.0
        %1063 = vmatprep.subr.mxu0 0.0
        %1064 = vmatpush2.msra.mxu0 0.0
        %1065 = vmatprep.subr.mxu0 0.0
        %1066 = vmatpush2.msra.mxu0 0.0
        %1067 = vmatprep.subr.mxu0 0.0
        %1068 = vmatpush2.msra.mxu0 0.0
        %1069 = vmatprep.subr.mxu0 0.0
        %1070 = vmatpush2.msra.mxu0 0.0
        %1071 = vmatprep.subr.mxu0 0.0
        %1072 = vmatpush2.msra.mxu0 0.0
        %1073 = vmatprep.subr.mxu0 0.0
        %1074 = vmatpush2.msra.mxu0 0.0
        %1075 = vmatprep.subr.mxu0 0.0
        %1076 = vmatpush2.msra.mxu0 0.0
        %1077 = vmatprep.subr.mxu0 0.0
        %1078 = vmatpush2.msra.mxu0 0.0
        %1079 = vmatprep.subr.mxu0 0.0
        %1080 = vmatpush2.msra.mxu0 0.0
        %1081 = vmatprep.subr.mxu0 0.0
        %1082 = vmatpush2.msra.mxu0 0.0
        %1083 = vmatprep.subr.mxu0 0.0
        %1084 = vmatpush2.msra.mxu0 0.0
        %1085 = vmatprep.mubr.f32.mxu0 0.0
        %1086 = vmatmul.mubr.f32.gmra.mxu0 %v1002
        %v1087 = vpop.f32.mrf.mxu0
        %v1088 = vadd.f32 0.0, %v1087
        %v1089 = vpop.f32.mrf.mxu0
        %1090 = vmatprep.mubr.f32.mxu0 0.0
        %1091 = vmatmul.mubr.f32.gmra.mxu0 %v1003
        %v1092 = vpop.f32.mrf.mxu0
        %v1093 = vadd.f32 0.0, %v1092
        %v1094 = vpop.f32.mrf.mxu0
        %1095 = vdwg.mxu0
        %1096 = vmatprep.subr.mxu0 0.0
        %1097 = vmatpush1.msra.mxu0 %v1001
        %1098 = vmatprep.subr.mxu0 0.0
        %1099 = vmatpush1.msra.mxu0 %v1000
        %1100 = vmatprep.subr.mxu0 0.0
        %1101 = vmatpush1.msra.mxu0 %v999
        %1102 = vmatprep.subr.mxu0 0.0
        %1103 = vmatpush1.msra.mxu0 %v998
        %1104 = vmatprep.subr.mxu0 0.0
        %1105 = vmatpush1.msra.mxu0 %v997
        %1106 = vmatprep.subr.mxu0 0.0
        %1107 = vmatpush1.msra.mxu0 %v996
        %1108 = vmatprep.subr.mxu0 0.0
        %1109 = vmatpush1.msra.mxu0 %v995
        %1110 = vmatprep.subr.mxu0 0.0
        %1111 = vmatpush1.msra.mxu0 %v994
        %1112 = vmatprep.subr.mxu0 0.0
        %1113 = vmatpush1.msra.mxu0 %v993
        %1114 = vmatprep.subr.mxu0 0.0
        %1115 = vmatpush1.msra.mxu0 %v992
        %1116 = vmatprep.subr.mxu0 0.0
        %1117 = vmatpush1.msra.mxu0 %v991
        %1118 = vmatprep.subr.mxu0 0.0
        %1119 = vmatpush1.msra.mxu0 %v990
        %1120 = vmatprep.subr.mxu0 0.0
        %1121 = vmatpush1.msra.mxu0 %v989
        %1122 = vmatprep.subr.mxu0 0.0
        %1123 = vmatpush1.msra.mxu0 %v988
        %1124 = vmatprep.subr.mxu0 0.0
        %1125 = vmatpush1.msra.mxu0 %v987
        %1126 = vmatprep.subr.mxu0 0.0
        %1127 = vmatpush1.msra.mxu0 %v986
        %1128 = vmatprep.subr.mxu0 0.0
        %1129 = vmatpush2.msra.mxu0 0.0
        %1130 = vmatprep.subr.mxu0 0.0
        %1131 = vmatpush2.msra.mxu0 0.0
        %1132 = vmatprep.subr.mxu0 0.0
        %1133 = vmatpush2.msra.mxu0 0.0
        %1134 = vmatprep.subr.mxu0 0.0
        %1135 = vmatpush2.msra.mxu0 0.0
        %1136 = vmatprep.subr.mxu0 0.0
        %1137 = vmatpush2.msra.mxu0 0.0
        %1138 = vmatprep.subr.mxu0 0.0
        %1139 = vmatpush2.msra.mxu0 0.0
        %1140 = vmatprep.subr.mxu0 0.0
        %1141 = vmatpush2.msra.mxu0 0.0
        %1142 = vmatprep.subr.mxu0 0.0
        %1143 = vmatpush2.msra.mxu0 0.0
        %1144 = vmatprep.subr.mxu0 0.0
        %1145 = vmatpush2.msra.mxu0 0.0
        %1146 = vmatprep.subr.mxu0 0.0
        %1147 = vmatpush2.msra.mxu0 0.0
        %1148 = vmatprep.subr.mxu0 0.0
        %1149 = vmatpush2.msra.mxu0 0.0
        %1150 = vmatprep.subr.mxu0 0.0
        %1151 = vmatpush2.msra.mxu0 0.0
        %1152 = vmatprep.subr.mxu0 0.0
        %1153 = vmatpush2.msra.mxu0 0.0
        %1154 = vmatprep.subr.mxu0 0.0
        %1155 = vmatpush2.msra.mxu0 0.0
        %1156 = vmatprep.subr.mxu0 0.0
        %1157 = vmatpush2.msra.mxu0 0.0
        %1158 = vmatprep.subr.mxu0 0.0
        %1159 = vmatpush2.msra.mxu0 0.0
        %1160 = vmatprep.mubr.f32.mxu0 0.0
        %1161 = vmatmul.mubr.f32.gmra.mxu0 %v984
        %v1162 = vpop.f32.mrf.mxu0
        %v1163 = vadd.f32 %v1088, %v1162
        %v1164 = vpop.f32.mrf.mxu0
        %1165 = vmatprep.mubr.f32.mxu0 0.0
        %1166 = vmatmul.mubr.f32.gmra.mxu0 %v985
        %v1167 = vpop.f32.mrf.mxu0
        %v1168 = vadd.f32 %v1093, %v1167
        %v1169 = vpop.f32.mrf.mxu0
        %1170 = vdwg.mxu0
        %v1171 = vld [vmem:[#allocation3 + $0x7] sm:$0xff]
        %v1172 = vld [vmem:[#allocation3 + $0xf] sm:$0xff]
        %s1173 = scalar_lea.vmem [#allocation7], 256
        %v1174 = vld [vmem:[%s1173] sm:$0xff]
        %v1175 = vld [vmem:[%s1173 + $0x8] sm:$0xff]
        %v1176 = vld [vmem:[%s1173 + $0x10] sm:$0xff]
        %v1177 = vld [vmem:[%s1173 + $0x18] sm:$0xff]
        %v1178 = vld [vmem:[%s1173 + $0x20] sm:$0xff]
        %v1179 = vld [vmem:[%s1173 + $0x28] sm:$0xff]
        %v1180 = vld [vmem:[%s1173 + $0x30] sm:$0xff]
        %v1181 = vld [vmem:[%s1173 + $0x38] sm:$0xff]
        %v1182 = vld [vmem:[%s1173 + $0x40] sm:$0xff]
        %v1183 = vld [vmem:[%s1173 + $0x48] sm:$0xff]
        %v1184 = vld [vmem:[%s1173 + $0x50] sm:$0xff]
        %v1185 = vld [vmem:[%s1173 + $0x58] sm:$0xff]
        %v1186 = vld [vmem:[%s1173 + $0x60] sm:$0xff]
        %v1187 = vld [vmem:[%s1173 + $0x68] sm:$0xff]
        %v1188 = vld [vmem:[%s1173 + $0x70] sm:$0xff]
        %v1189 = vld [vmem:[%s1173 + $0x78] sm:$0xff]
        %1190 = vmatprep.subr.mxu0 0.0
        %1191 = vmatpush1.msra.mxu0 %v1189
        %1192 = vmatprep.subr.mxu0 0.0
        %1193 = vmatpush1.msra.mxu0 %v1188
        %1194 = vmatprep.subr.mxu0 0.0
        %1195 = vmatpush1.msra.mxu0 %v1187
        %1196 = vmatprep.subr.mxu0 0.0
        %1197 = vmatpush1.msra.mxu0 %v1186
        %1198 = vmatprep.subr.mxu0 0.0
        %1199 = vmatpush1.msra.mxu0 %v1185
        %1200 = vmatprep.subr.mxu0 0.0
        %1201 = vmatpush1.msra.mxu0 %v1184
        %1202 = vmatprep.subr.mxu0 0.0
        %1203 = vmatpush1.msra.mxu0 %v1183
        %1204 = vmatprep.subr.mxu0 0.0
        %1205 = vmatpush1.msra.mxu0 %v1182
        %1206 = vmatprep.subr.mxu0 0.0
        %1207 = vmatpush1.msra.mxu0 %v1181
        %1208 = vmatprep.subr.mxu0 0.0
        %1209 = vmatpush1.msra.mxu0 %v1180
        %1210 = vmatprep.subr.mxu0 0.0
        %1211 = vmatpush1.msra.mxu0 %v1179
        %1212 = vmatprep.subr.mxu0 0.0
        %1213 = vmatpush1.msra.mxu0 %v1178
        %1214 = vmatprep.subr.mxu0 0.0
        %1215 = vmatpush1.msra.mxu0 %v1177
        %1216 = vmatprep.subr.mxu0 0.0
        %1217 = vmatpush1.msra.mxu0 %v1176
        %1218 = vmatprep.subr.mxu0 0.0
        %1219 = vmatpush1.msra.mxu0 %v1175
        %1220 = vmatprep.subr.mxu0 0.0
        %1221 = vmatpush1.msra.mxu0 %v1174
        %1222 = vmatprep.subr.mxu0 0.0
        %1223 = vmatpush2.msra.mxu0 0.0
        %1224 = vmatprep.subr.mxu0 0.0
        %1225 = vmatpush2.msra.mxu0 0.0
        %1226 = vmatprep.subr.mxu0 0.0
        %1227 = vmatpush2.msra.mxu0 0.0
        %1228 = vmatprep.subr.mxu0 0.0
        %1229 = vmatpush2.msra.mxu0 0.0
        %1230 = vmatprep.subr.mxu0 0.0
        %1231 = vmatpush2.msra.mxu0 0.0
        %1232 = vmatprep.subr.mxu0 0.0
        %1233 = vmatpush2.msra.mxu0 0.0
        %1234 = vmatprep.subr.mxu0 0.0
        %1235 = vmatpush2.msra.mxu0 0.0
        %1236 = vmatprep.subr.mxu0 0.0
        %1237 = vmatpush2.msra.mxu0 0.0
        %1238 = vmatprep.subr.mxu0 0.0
        %1239 = vmatpush2.msra.mxu0 0.0
        %1240 = vmatprep.subr.mxu0 0.0
        %1241 = vmatpush2.msra.mxu0 0.0
        %1242 = vmatprep.subr.mxu0 0.0
        %1243 = vmatpush2.msra.mxu0 0.0
        %1244 = vmatprep.subr.mxu0 0.0
        %1245 = vmatpush2.msra.mxu0 0.0
        %1246 = vmatprep.subr.mxu0 0.0
        %1247 = vmatpush2.msra.mxu0 0.0
        %1248 = vmatprep.subr.mxu0 0.0
        %1249 = vmatpush2.msra.mxu0 0.0
        %1250 = vmatprep.subr.mxu0 0.0
        %1251 = vmatpush2.msra.mxu0 0.0
        %1252 = vmatprep.subr.mxu0 0.0
        %1253 = vmatpush2.msra.mxu0 0.0
        %1254 = vmatprep.mubr.f32.mxu0 0.0
        %1255 = vmatmul.mubr.f32.gmra.mxu0 %v1171
        %v1256 = vpop.f32.mrf.mxu0
        %v1257 = vadd.f32 0.0, %v1256
        %v1258 = vpop.f32.mrf.mxu0
        %1259 = vmatprep.mubr.f32.mxu0 0.0
        %1260 = vmatmul.mubr.f32.gmra.mxu0 %v1172
        %v1261 = vpop.f32.mrf.mxu0
        %v1262 = vadd.f32 0.0, %v1261
        %v1263 = vpop.f32.mrf.mxu0
        %1264 = vdwg.mxu0
        %v1265 = vadd.f32 %v1163, %v1257
        %v1266 = vadd.f32 %v1168, %v1262
        %v1267 = vld [vmem:[#allocation3 + $0x8] sm:$0xff]
        %v1268 = vld [vmem:[#allocation3 + $0x10] sm:$0xff]
        %s1269 = scalar_lea.vmem [#allocation7], 384
        %v1270 = vld [vmem:[%s1269] sm:$0xff]
        %v1271 = vld [vmem:[%s1269 + $0x8] sm:$0xff]
        %v1272 = vld [vmem:[%s1269 + $0x10] sm:$0xff]
        %v1273 = vld [vmem:[%s1269 + $0x18] sm:$0xff]
        %v1274 = vld [vmem:[%s1269 + $0x20] sm:$0xff]
        %v1275 = vld [vmem:[%s1269 + $0x28] sm:$0xff]
        %v1276 = vld [vmem:[%s1269 + $0x30] sm:$0xff]
        %v1277 = vld [vmem:[%s1269 + $0x38] sm:$0xff]
        %v1278 = vld [vmem:[%s1269 + $0x40] sm:$0xff]
        %v1279 = vld [vmem:[%s1269 + $0x48] sm:$0xff]
        %v1280 = vld [vmem:[%s1269 + $0x50] sm:$0xff]
        %v1281 = vld [vmem:[%s1269 + $0x58] sm:$0xff]
        %v1282 = vld [vmem:[%s1269 + $0x60] sm:$0xff]
        %v1283 = vld [vmem:[%s1269 + $0x68] sm:$0xff]
        %v1284 = vld [vmem:[%s1269 + $0x70] sm:$0xff]
        %v1285 = vld [vmem:[%s1269 + $0x78] sm:$0xff]
        %1286 = vmatprep.subr.mxu0 0.0
        %1287 = vmatpush1.msra.mxu0 %v1285
        %1288 = vmatprep.subr.mxu0 0.0
        %1289 = vmatpush1.msra.mxu0 %v1284
        %1290 = vmatprep.subr.mxu0 0.0
        %1291 = vmatpush1.msra.mxu0 %v1283
        %1292 = vmatprep.subr.mxu0 0.0
        %1293 = vmatpush1.msra.mxu0 %v1282
        %1294 = vmatprep.subr.mxu0 0.0
        %1295 = vmatpush1.msra.mxu0 %v1281
        %1296 = vmatprep.subr.mxu0 0.0
        %1297 = vmatpush1.msra.mxu0 %v1280
        %1298 = vmatprep.subr.mxu0 0.0
        %1299 = vmatpush1.msra.mxu0 %v1279
        %1300 = vmatprep.subr.mxu0 0.0
        %1301 = vmatpush1.msra.mxu0 %v1278
        %1302 = vmatprep.subr.mxu0 0.0
        %1303 = vmatpush1.msra.mxu0 %v1277
        %1304 = vmatprep.subr.mxu0 0.0
        %1305 = vmatpush1.msra.mxu0 %v1276
        %1306 = vmatprep.subr.mxu0 0.0
        %1307 = vmatpush1.msra.mxu0 %v1275
        %1308 = vmatprep.subr.mxu0 0.0
        %1309 = vmatpush1.msra.mxu0 %v1274
        %1310 = vmatprep.subr.mxu0 0.0
        %1311 = vmatpush1.msra.mxu0 %v1273
        %1312 = vmatprep.subr.mxu0 0.0
        %1313 = vmatpush1.msra.mxu0 %v1272
        %1314 = vmatprep.subr.mxu0 0.0
        %1315 = vmatpush1.msra.mxu0 %v1271
        %1316 = vmatprep.subr.mxu0 0.0
        %1317 = vmatpush1.msra.mxu0 %v1270
        %1318 = vmatprep.subr.mxu0 0.0
        %1319 = vmatpush2.msra.mxu0 0.0
        %1320 = vmatprep.subr.mxu0 0.0
        %1321 = vmatpush2.msra.mxu0 0.0
        %1322 = vmatprep.subr.mxu0 0.0
        %1323 = vmatpush2.msra.mxu0 0.0
        %1324 = vmatprep.subr.mxu0 0.0
        %1325 = vmatpush2.msra.mxu0 0.0
        %1326 = vmatprep.subr.mxu0 0.0
        %1327 = vmatpush2.msra.mxu0 0.0
        %1328 = vmatprep.subr.mxu0 0.0
        %1329 = vmatpush2.msra.mxu0 0.0
        %1330 = vmatprep.subr.mxu0 0.0
        %1331 = vmatpush2.msra.mxu0 0.0
        %1332 = vmatprep.subr.mxu0 0.0
        %1333 = vmatpush2.msra.mxu0 0.0
        %1334 = vmatprep.subr.mxu0 0.0
        %1335 = vmatpush2.msra.mxu0 0.0
        %1336 = vmatprep.subr.mxu0 0.0
        %1337 = vmatpush2.msra.mxu0 0.0
        %1338 = vmatprep.subr.mxu0 0.0
        %1339 = vmatpush2.msra.mxu0 0.0
        %1340 = vmatprep.subr.mxu0 0.0
        %1341 = vmatpush2.msra.mxu0 0.0
        %1342 = vmatprep.subr.mxu0 0.0
        %1343 = vmatpush2.msra.mxu0 0.0
        %1344 = vmatprep.subr.mxu0 0.0
        %1345 = vmatpush2.msra.mxu0 0.0
        %1346 = vmatprep.subr.mxu0 0.0
        %1347 = vmatpush2.msra.mxu0 0.0
        %1348 = vmatprep.subr.mxu0 0.0
        %1349 = vmatpush2.msra.mxu0 0.0
        %1350 = vmatprep.mubr.f32.mxu0 0.0
        %1351 = vmatmul.mubr.f32.gmra.mxu0 %v1267
        %v1352 = vpop.f32.mrf.mxu0
        %v1353 = vadd.f32 0.0, %v1352
        %v1354 = vpop.f32.mrf.mxu0
        %1355 = vmatprep.mubr.f32.mxu0 0.0
        %1356 = vmatmul.mubr.f32.gmra.mxu0 %v1268
        %v1357 = vpop.f32.mrf.mxu0
        %v1358 = vadd.f32 0.0, %v1357
        %v1359 = vpop.f32.mrf.mxu0
        %1360 = vdwg.mxu0
        %v1361 = vadd.f32 %v1265, %v1353
        %v1362 = vadd.f32 %v1266, %v1358
        %v1363 = vld [vmem:[#allocation3 + $0x9] sm:$0xff]
        %v1364 = vld [vmem:[#allocation3 + $0x11] sm:$0xff]
        %s1365 = scalar_lea.vmem [#allocation7], 512
        %v1366 = vld [vmem:[%s1365] sm:$0xff]
        %v1367 = vld [vmem:[%s1365 + $0x8] sm:$0xff]
        %v1368 = vld [vmem:[%s1365 + $0x10] sm:$0xff]
        %v1369 = vld [vmem:[%s1365 + $0x18] sm:$0xff]
        %v1370 = vld [vmem:[%s1365 + $0x20] sm:$0xff]
        %v1371 = vld [vmem:[%s1365 + $0x28] sm:$0xff]
        %v1372 = vld [vmem:[%s1365 + $0x30] sm:$0xff]
        %v1373 = vld [vmem:[%s1365 + $0x38] sm:$0xff]
        %v1374 = vld [vmem:[%s1365 + $0x40] sm:$0xff]
        %v1375 = vld [vmem:[%s1365 + $0x48] sm:$0xff]
        %v1376 = vld [vmem:[%s1365 + $0x50] sm:$0xff]
        %v1377 = vld [vmem:[%s1365 + $0x58] sm:$0xff]
        %v1378 = vld [vmem:[%s1365 + $0x60] sm:$0xff]
        %v1379 = vld [vmem:[%s1365 + $0x68] sm:$0xff]
        %v1380 = vld [vmem:[%s1365 + $0x70] sm:$0xff]
        %v1381 = vld [vmem:[%s1365 + $0x78] sm:$0xff]
        %1382 = vmatprep.subr.mxu0 0.0
        %1383 = vmatpush1.msra.mxu0 %v1381
        %1384 = vmatprep.subr.mxu0 0.0
        %1385 = vmatpush1.msra.mxu0 %v1380
        %1386 = vmatprep.subr.mxu0 0.0
        %1387 = vmatpush1.msra.mxu0 %v1379
        %1388 = vmatprep.subr.mxu0 0.0
        %1389 = vmatpush1.msra.mxu0 %v1378
        %1390 = vmatprep.subr.mxu0 0.0
        %1391 = vmatpush1.msra.mxu0 %v1377
        %1392 = vmatprep.subr.mxu0 0.0
        %1393 = vmatpush1.msra.mxu0 %v1376
        %1394 = vmatprep.subr.mxu0 0.0
        %1395 = vmatpush1.msra.mxu0 %v1375
        %1396 = vmatprep.subr.mxu0 0.0
        %1397 = vmatpush1.msra.mxu0 %v1374
        %1398 = vmatprep.subr.mxu0 0.0
        %1399 = vmatpush1.msra.mxu0 %v1373
        %1400 = vmatprep.subr.mxu0 0.0
        %1401 = vmatpush1.msra.mxu0 %v1372
        %1402 = vmatprep.subr.mxu0 0.0
        %1403 = vmatpush1.msra.mxu0 %v1371
        %1404 = vmatprep.subr.mxu0 0.0
        %1405 = vmatpush1.msra.mxu0 %v1370
        %1406 = vmatprep.subr.mxu0 0.0
        %1407 = vmatpush1.msra.mxu0 %v1369
        %1408 = vmatprep.subr.mxu0 0.0
        %1409 = vmatpush1.msra.mxu0 %v1368
        %1410 = vmatprep.subr.mxu0 0.0
        %1411 = vmatpush1.msra.mxu0 %v1367
        %1412 = vmatprep.subr.mxu0 0.0
        %1413 = vmatpush1.msra.mxu0 %v1366
        %1414 = vmatprep.subr.mxu0 0.0
        %1415 = vmatpush2.msra.mxu0 0.0
        %1416 = vmatprep.subr.mxu0 0.0
        %1417 = vmatpush2.msra.mxu0 0.0
        %1418 = vmatprep.subr.mxu0 0.0
        %1419 = vmatpush2.msra.mxu0 0.0
        %1420 = vmatprep.subr.mxu0 0.0
        %1421 = vmatpush2.msra.mxu0 0.0
        %1422 = vmatprep.subr.mxu0 0.0
        %1423 = vmatpush2.msra.mxu0 0.0
        %1424 = vmatprep.subr.mxu0 0.0
        %1425 = vmatpush2.msra.mxu0 0.0
        %1426 = vmatprep.subr.mxu0 0.0
        %1427 = vmatpush2.msra.mxu0 0.0
        %1428 = vmatprep.subr.mxu0 0.0
        %1429 = vmatpush2.msra.mxu0 0.0
        %1430 = vmatprep.subr.mxu0 0.0
        %1431 = vmatpush2.msra.mxu0 0.0
        %1432 = vmatprep.subr.mxu0 0.0
        %1433 = vmatpush2.msra.mxu0 0.0
        %1434 = vmatprep.subr.mxu0 0.0
        %1435 = vmatpush2.msra.mxu0 0.0
        %1436 = vmatprep.subr.mxu0 0.0
        %1437 = vmatpush2.msra.mxu0 0.0
        %1438 = vmatprep.subr.mxu0 0.0
        %1439 = vmatpush2.msra.mxu0 0.0
        %1440 = vmatprep.subr.mxu0 0.0
        %1441 = vmatpush2.msra.mxu0 0.0
        %1442 = vmatprep.subr.mxu0 0.0
        %1443 = vmatpush2.msra.mxu0 0.0
        %1444 = vmatprep.subr.mxu0 0.0
        %1445 = vmatpush2.msra.mxu0 0.0
        %1446 = vmatprep.mubr.f32.mxu0 0.0
        %1447 = vmatmul.mubr.f32.gmra.mxu0 %v1363
        %v1448 = vpop.f32.mrf.mxu0
        %v1449 = vadd.f32 0.0, %v1448
        %v1450 = vpop.f32.mrf.mxu0
        %1451 = vmatprep.mubr.f32.mxu0 0.0
        %1452 = vmatmul.mubr.f32.gmra.mxu0 %v1364
        %v1453 = vpop.f32.mrf.mxu0
        %v1454 = vadd.f32 0.0, %v1453
        %v1455 = vpop.f32.mrf.mxu0
        %1456 = vdwg.mxu0
        %v1457 = vadd.f32 %v1361, %v1449
        %v1458 = vadd.f32 %v1362, %v1454
        %v1459 = vld [vmem:[#allocation3 + $0xa] sm:$0xff]
        %v1460 = vld [vmem:[#allocation3 + $0x12] sm:$0xff]
        %s1461 = scalar_lea.vmem [#allocation7], 640
        %v1462 = vld [vmem:[%s1461] sm:$0xff]
        %v1463 = vld [vmem:[%s1461 + $0x8] sm:$0xff]
        %v1464 = vld [vmem:[%s1461 + $0x10] sm:$0xff]
        %v1465 = vld [vmem:[%s1461 + $0x18] sm:$0xff]
        %v1466 = vld [vmem:[%s1461 + $0x20] sm:$0xff]
        %v1467 = vld [vmem:[%s1461 + $0x28] sm:$0xff]
        %v1468 = vld [vmem:[%s1461 + $0x30] sm:$0xff]
        %v1469 = vld [vmem:[%s1461 + $0x38] sm:$0xff]
        %v1470 = vld [vmem:[%s1461 + $0x40] sm:$0xff]
        %v1471 = vld [vmem:[%s1461 + $0x48] sm:$0xff]
        %v1472 = vld [vmem:[%s1461 + $0x50] sm:$0xff]
        %v1473 = vld [vmem:[%s1461 + $0x58] sm:$0xff]
        %v1474 = vld [vmem:[%s1461 + $0x60] sm:$0xff]
        %v1475 = vld [vmem:[%s1461 + $0x68] sm:$0xff]
        %v1476 = vld [vmem:[%s1461 + $0x70] sm:$0xff]
        %v1477 = vld [vmem:[%s1461 + $0x78] sm:$0xff]
        %1478 = vmatprep.subr.mxu0 0.0
        %1479 = vmatpush1.msra.mxu0 %v1477
        %1480 = vmatprep.subr.mxu0 0.0
        %1481 = vmatpush1.msra.mxu0 %v1476
        %1482 = vmatprep.subr.mxu0 0.0
        %1483 = vmatpush1.msra.mxu0 %v1475
        %1484 = vmatprep.subr.mxu0 0.0
        %1485 = vmatpush1.msra.mxu0 %v1474
        %1486 = vmatprep.subr.mxu0 0.0
        %1487 = vmatpush1.msra.mxu0 %v1473
        %1488 = vmatprep.subr.mxu0 0.0
        %1489 = vmatpush1.msra.mxu0 %v1472
        %1490 = vmatprep.subr.mxu0 0.0
        %1491 = vmatpush1.msra.mxu0 %v1471
        %1492 = vmatprep.subr.mxu0 0.0
        %1493 = vmatpush1.msra.mxu0 %v1470
        %1494 = vmatprep.subr.mxu0 0.0
        %1495 = vmatpush1.msra.mxu0 %v1469
        %1496 = vmatprep.subr.mxu0 0.0
        %1497 = vmatpush1.msra.mxu0 %v1468
        %1498 = vmatprep.subr.mxu0 0.0
        %1499 = vmatpush1.msra.mxu0 %v1467
        %1500 = vmatprep.subr.mxu0 0.0
        %1501 = vmatpush1.msra.mxu0 %v1466
        %1502 = vmatprep.subr.mxu0 0.0
        %1503 = vmatpush1.msra.mxu0 %v1465
        %1504 = vmatprep.subr.mxu0 0.0
        %1505 = vmatpush1.msra.mxu0 %v1464
        %1506 = vmatprep.subr.mxu0 0.0
        %1507 = vmatpush1.msra.mxu0 %v1463
        %1508 = vmatprep.subr.mxu0 0.0
        %1509 = vmatpush1.msra.mxu0 %v1462
        %1510 = vmatprep.subr.mxu0 0.0
        %1511 = vmatpush2.msra.mxu0 0.0
        %1512 = vmatprep.subr.mxu0 0.0
        %1513 = vmatpush2.msra.mxu0 0.0
        %1514 = vmatprep.subr.mxu0 0.0
        %1515 = vmatpush2.msra.mxu0 0.0
        %1516 = vmatprep.subr.mxu0 0.0
        %1517 = vmatpush2.msra.mxu0 0.0
        %1518 = vmatprep.subr.mxu0 0.0
        %1519 = vmatpush2.msra.mxu0 0.0
        %1520 = vmatprep.subr.mxu0 0.0
        %1521 = vmatpush2.msra.mxu0 0.0
        %1522 = vmatprep.subr.mxu0 0.0
        %1523 = vmatpush2.msra.mxu0 0.0
        %1524 = vmatprep.subr.mxu0 0.0
        %1525 = vmatpush2.msra.mxu0 0.0
        %1526 = vmatprep.subr.mxu0 0.0
        %1527 = vmatpush2.msra.mxu0 0.0
        %1528 = vmatprep.subr.mxu0 0.0
        %1529 = vmatpush2.msra.mxu0 0.0
        %1530 = vmatprep.subr.mxu0 0.0
        %1531 = vmatpush2.msra.mxu0 0.0
        %1532 = vmatprep.subr.mxu0 0.0
        %1533 = vmatpush2.msra.mxu0 0.0
        %1534 = vmatprep.subr.mxu0 0.0
        %1535 = vmatpush2.msra.mxu0 0.0
        %1536 = vmatprep.subr.mxu0 0.0
        %1537 = vmatpush2.msra.mxu0 0.0
        %1538 = vmatprep.subr.mxu0 0.0
        %1539 = vmatpush2.msra.mxu0 0.0
        %1540 = vmatprep.subr.mxu0 0.0
        %1541 = vmatpush2.msra.mxu0 0.0
        %1542 = vmatprep.mubr.f32.mxu0 0.0
        %1543 = vmatmul.mubr.f32.gmra.mxu0 %v1459
        %v1544 = vpop.f32.mrf.mxu0
        %v1545 = vadd.f32 0.0, %v1544
        %v1546 = vpop.f32.mrf.mxu0
        %1547 = vmatprep.mubr.f32.mxu0 0.0
        %1548 = vmatmul.mubr.f32.gmra.mxu0 %v1460
        %v1549 = vpop.f32.mrf.mxu0
        %v1550 = vadd.f32 0.0, %v1549
        %v1551 = vpop.f32.mrf.mxu0
        %1552 = vdwg.mxu0
        %v1553 = vadd.f32 %v1457, %v1545
        %v1554 = vadd.f32 %v1458, %v1550
        %v1555 = vld [vmem:[#allocation3 + $0xb] sm:$0xff]
        %v1556 = vld [vmem:[#allocation3 + $0x13] sm:$0xff]
        %s1557 = scalar_lea.vmem [#allocation7], 768
        %v1558 = vld [vmem:[%s1557] sm:$0xff]
        %v1559 = vld [vmem:[%s1557 + $0x8] sm:$0xff]
        %v1560 = vld [vmem:[%s1557 + $0x10] sm:$0xff]
        %v1561 = vld [vmem:[%s1557 + $0x18] sm:$0xff]
        %v1562 = vld [vmem:[%s1557 + $0x20] sm:$0xff]
        %v1563 = vld [vmem:[%s1557 + $0x28] sm:$0xff]
        %v1564 = vld [vmem:[%s1557 + $0x30] sm:$0xff]
        %v1565 = vld [vmem:[%s1557 + $0x38] sm:$0xff]
        %v1566 = vld [vmem:[%s1557 + $0x40] sm:$0xff]
        %v1567 = vld [vmem:[%s1557 + $0x48] sm:$0xff]
        %v1568 = vld [vmem:[%s1557 + $0x50] sm:$0xff]
        %v1569 = vld [vmem:[%s1557 + $0x58] sm:$0xff]
        %v1570 = vld [vmem:[%s1557 + $0x60] sm:$0xff]
        %v1571 = vld [vmem:[%s1557 + $0x68] sm:$0xff]
        %v1572 = vld [vmem:[%s1557 + $0x70] sm:$0xff]
        %v1573 = vld [vmem:[%s1557 + $0x78] sm:$0xff]
        %1574 = vmatprep.subr.mxu0 0.0
        %1575 = vmatpush1.msra.mxu0 %v1573
        %1576 = vmatprep.subr.mxu0 0.0
        %1577 = vmatpush1.msra.mxu0 %v1572
        %1578 = vmatprep.subr.mxu0 0.0
        %1579 = vmatpush1.msra.mxu0 %v1571
        %1580 = vmatprep.subr.mxu0 0.0
        %1581 = vmatpush1.msra.mxu0 %v1570
        %1582 = vmatprep.subr.mxu0 0.0
        %1583 = vmatpush1.msra.mxu0 %v1569
        %1584 = vmatprep.subr.mxu0 0.0
        %1585 = vmatpush1.msra.mxu0 %v1568
        %1586 = vmatprep.subr.mxu0 0.0
        %1587 = vmatpush1.msra.mxu0 %v1567
        %1588 = vmatprep.subr.mxu0 0.0
        %1589 = vmatpush1.msra.mxu0 %v1566
        %1590 = vmatprep.subr.mxu0 0.0
        %1591 = vmatpush1.msra.mxu0 %v1565
        %1592 = vmatprep.subr.mxu0 0.0
        %1593 = vmatpush1.msra.mxu0 %v1564
        %1594 = vmatprep.subr.mxu0 0.0
        %1595 = vmatpush1.msra.mxu0 %v1563
        %1596 = vmatprep.subr.mxu0 0.0
        %1597 = vmatpush1.msra.mxu0 %v1562
        %1598 = vmatprep.subr.mxu0 0.0
        %1599 = vmatpush1.msra.mxu0 %v1561
        %1600 = vmatprep.subr.mxu0 0.0
        %1601 = vmatpush1.msra.mxu0 %v1560
        %1602 = vmatprep.subr.mxu0 0.0
        %1603 = vmatpush1.msra.mxu0 %v1559
        %1604 = vmatprep.subr.mxu0 0.0
        %1605 = vmatpush1.msra.mxu0 %v1558
        %1606 = vmatprep.subr.mxu0 0.0
        %1607 = vmatpush2.msra.mxu0 0.0
        %1608 = vmatprep.subr.mxu0 0.0
        %1609 = vmatpush2.msra.mxu0 0.0
        %1610 = vmatprep.subr.mxu0 0.0
        %1611 = vmatpush2.msra.mxu0 0.0
        %1612 = vmatprep.subr.mxu0 0.0
        %1613 = vmatpush2.msra.mxu0 0.0
        %1614 = vmatprep.subr.mxu0 0.0
        %1615 = vmatpush2.msra.mxu0 0.0
        %1616 = vmatprep.subr.mxu0 0.0
        %1617 = vmatpush2.msra.mxu0 0.0
        %1618 = vmatprep.subr.mxu0 0.0
        %1619 = vmatpush2.msra.mxu0 0.0
        %1620 = vmatprep.subr.mxu0 0.0
        %1621 = vmatpush2.msra.mxu0 0.0
        %1622 = vmatprep.subr.mxu0 0.0
        %1623 = vmatpush2.msra.mxu0 0.0
        %1624 = vmatprep.subr.mxu0 0.0
        %1625 = vmatpush2.msra.mxu0 0.0
        %1626 = vmatprep.subr.mxu0 0.0
        %1627 = vmatpush2.msra.mxu0 0.0
        %1628 = vmatprep.subr.mxu0 0.0
        %1629 = vmatpush2.msra.mxu0 0.0
        %1630 = vmatprep.subr.mxu0 0.0
        %1631 = vmatpush2.msra.mxu0 0.0
        %1632 = vmatprep.subr.mxu0 0.0
        %1633 = vmatpush2.msra.mxu0 0.0
        %1634 = vmatprep.subr.mxu0 0.0
        %1635 = vmatpush2.msra.mxu0 0.0
        %1636 = vmatprep.subr.mxu0 0.0
        %1637 = vmatpush2.msra.mxu0 0.0
        %1638 = vmatprep.mubr.f32.mxu0 0.0
        %1639 = vmatmul.mubr.f32.gmra.mxu0 %v1555
        %v1640 = vpop.f32.mrf.mxu0
        %v1641 = vadd.f32 0.0, %v1640
        %v1642 = vpop.f32.mrf.mxu0
        %1643 = vmatprep.mubr.f32.mxu0 0.0
        %1644 = vmatmul.mubr.f32.gmra.mxu0 %v1556
        %v1645 = vpop.f32.mrf.mxu0
        %v1646 = vadd.f32 0.0, %v1645
        %v1647 = vpop.f32.mrf.mxu0
        %1648 = vdwg.mxu0
        %v1649 = vadd.f32 %v1553, %v1641
        %v1650 = vadd.f32 %v1554, %v1646
        %v1651 = vld [vmem:[%s4] sm:$0x1]
        %v1653 = vlaneseq
        %v1654 = vshrl.u32 %v1653, 7
        %v1655 = vsub.s32 0, %v1654
        %v1656 = vrot.slane %v1651, %v1655
        %v1658 = vadd.f32 %v1649, %v1656
        %v1659 = vadd.f32 %v1650, %v1656
        %v1660 = vld [vmem:[%s5] sm:$0xff]
        %v1661 = vld [vmem:[%s5 + $0x8] sm:$0xff]
        %v1662 = vld [vmem:[%s5 + $0x10] sm:$0xff]
        %v1663 = vld [vmem:[%s5 + $0x18] sm:$0xff]
        %v1664 = vld [vmem:[%s5 + $0x20] sm:$0xff]
        %v1665 = vld [vmem:[%s5 + $0x28] sm:$0xff]
        %v1666 = vld [vmem:[%s5 + $0x30] sm:$0xff]
        %v1667 = vld [vmem:[%s5 + $0x38] sm:$0xff]
        %v1668 = vld [vmem:[%s5 + $0x40] sm:$0xff]
        %v1669 = vld [vmem:[%s5 + $0x48] sm:$0xff]
        %v1670 = vld [vmem:[%s5 + $0x50] sm:$0xff]
        %v1671 = vld [vmem:[%s5 + $0x58] sm:$0xff]
        %v1672 = vld [vmem:[%s5 + $0x60] sm:$0xff]
        %v1673 = vld [vmem:[%s5 + $0x68] sm:$0xff]
        %v1674 = vld [vmem:[%s5 + $0x70] sm:$0xff]
        %v1675 = vld [vmem:[%s5 + $0x78] sm:$0xff]
        %v1676 = vld [vmem:[%s6] sm:$0x1]
        %v1678 = vlaneseq
        %v1679 = vshrl.u32 %v1678, 7
        %v1680 = vsub.s32 0, %v1679
        %v1681 = vrot.slane %v1676, %v1680
        %1683 = vmatprep.subr.mxu0 0.0
        %1684 = vmatpush1.msra.mxu0 %v1675
        %1685 = vmatprep.subr.mxu0 0.0
        %1686 = vmatpush1.msra.mxu0 %v1674
        %1687 = vmatprep.subr.mxu0 0.0
        %1688 = vmatpush1.msra.mxu0 %v1673
        %1689 = vmatprep.subr.mxu0 0.0
        %1690 = vmatpush1.msra.mxu0 %v1672
        %1691 = vmatprep.subr.mxu0 0.0
        %1692 = vmatpush1.msra.mxu0 %v1671
        %1693 = vmatprep.subr.mxu0 0.0
        %1694 = vmatpush1.msra.mxu0 %v1670
        %1695 = vmatprep.subr.mxu0 0.0
        %1696 = vmatpush1.msra.mxu0 %v1669
        %1697 = vmatprep.subr.mxu0 0.0
        %1698 = vmatpush1.msra.mxu0 %v1668
        %1699 = vmatprep.subr.mxu0 0.0
        %1700 = vmatpush1.msra.mxu0 %v1667
        %1701 = vmatprep.subr.mxu0 0.0
        %1702 = vmatpush1.msra.mxu0 %v1666
        %1703 = vmatprep.subr.mxu0 0.0
        %1704 = vmatpush1.msra.mxu0 %v1665
        %1705 = vmatprep.subr.mxu0 0.0
        %1706 = vmatpush1.msra.mxu0 %v1664
        %1707 = vmatprep.subr.mxu0 0.0
        %1708 = vmatpush1.msra.mxu0 %v1663
        %1709 = vmatprep.subr.mxu0 0.0
        %1710 = vmatpush1.msra.mxu0 %v1662
        %1711 = vmatprep.subr.mxu0 0.0
        %1712 = vmatpush1.msra.mxu0 %v1661
        %1713 = vmatprep.subr.mxu0 0.0
        %1714 = vmatpush1.msra.mxu0 %v1660
        %1715 = vmatprep.subr.mxu0 0.0
        %1716 = vmatpush2.msra.mxu0 0.0
        %1717 = vmatprep.subr.mxu0 0.0
        %1718 = vmatpush2.msra.mxu0 0.0
        %1719 = vmatprep.subr.mxu0 0.0
        %1720 = vmatpush2.msra.mxu0 0.0
        %1721 = vmatprep.subr.mxu0 0.0
        %1722 = vmatpush2.msra.mxu0 0.0
        %1723 = vmatprep.subr.mxu0 0.0
        %1724 = vmatpush2.msra.mxu0 0.0
        %1725 = vmatprep.subr.mxu0 0.0
        %1726 = vmatpush2.msra.mxu0 0.0
        %1727 = vmatprep.subr.mxu0 0.0
        %1728 = vmatpush2.msra.mxu0 0.0
        %1729 = vmatprep.subr.mxu0 0.0
        %1730 = vmatpush2.msra.mxu0 0.0
        %1731 = vmatprep.subr.mxu0 0.0
        %1732 = vmatpush2.msra.mxu0 0.0
        %1733 = vmatprep.subr.mxu0 0.0
        %1734 = vmatpush2.msra.mxu0 0.0
        %1735 = vmatprep.subr.mxu0 0.0
        %1736 = vmatpush2.msra.mxu0 0.0
        %1737 = vmatprep.subr.mxu0 0.0
        %1738 = vmatpush2.msra.mxu0 0.0
        %1739 = vmatprep.subr.mxu0 0.0
        %1740 = vmatpush2.msra.mxu0 0.0
        %1741 = vmatprep.subr.mxu0 0.0
        %1742 = vmatpush2.msra.mxu0 0.0
        %1743 = vmatprep.subr.mxu0 0.0
        %1744 = vmatpush2.msra.mxu0 0.0
        %1745 = vmatprep.subr.mxu0 0.0
        %1746 = vmatpush2.msra.mxu0 0.0
        %1747 = vmatprep.mubr.f32.mxu0 0.0
        %1748 = vmatmul.mubr.f32.gmra.mxu0 %v1658
        %v1749 = vpop.f32.mrf.mxu0
        %v1750 = vadd.f32 %v1681, %v1749
        %v1751 = vpop.f32.mrf.mxu0
        %1752 = vmatprep.mubr.f32.mxu0 0.0
        %1753 = vmatmul.mubr.f32.gmra.mxu0 %v1659
        %v1754 = vpop.f32.mrf.mxu0
        %v1755 = vadd.f32 %v1681, %v1754
        %v1756 = vpop.f32.mrf.mxu0
        %1757 = vdwg.mxu0
        %1758 = vst.msk [vmem:[%s301] sm:$0xff] %vm309, %v1750
        %1759 = vst.msk [vmem:[%s301 + $0x8] sm:$0xff] %vm309, %v1755
        %s1760 = sand.u32 %s183, 1
        %s1761 = scalar_lea.sflag [#allocation6], %s1760
        %s1762 = sand.u32 %s183, 1
        %s1763 = smul.addr %s1762, 16
        %s1764 = scalar_lea.vmem [#allocation9], %s1763
        // Predicated region
        $region57: #{tpu_custom_call.1} parent=47 // pred_check
          %p1765 = pneg %p193
        $region58: #{tpu_custom_call.1} parent=47 // pred_check_branch
          %1767 = sbr.rel (%p1765) target = $region60
        $region59: #{tpu_custom_call.1} parent=47 // pred_region
          %s1769 = ssub.s32 256, 256
          %1770 = vsyncadd %s1761, %s1769
          %s1771 = smul.addr %s23, 2
          %s1772 = smul.addr %s1771, 128
          %s1773 = scalar_lea.hbm %s7, %s1772
          %s1774 = sshll.u32 %s1764, 4
          %s1775 = int_to_ptr.vmem [resolvable:$true] %s1774
          %1780 = dma.vmem_to_hbm [thread:$0]  %s1775, 256, %s1773, %s1761, 128, 128, 8
        $region60: #{tpu_custom_call.1} parent=47 // pred_fallthru
          _
      $region48: #{tpu_custom_call.1} parent=5 // pred_fallthru
        _
      %p1781 = scmp.le.s32.totalorder 2, %s18
      // Predicated region
      $region61: #{tpu_custom_call.1} parent=5 // pred_check
        %p1782 = pneg %p1781
      $region62: #{tpu_custom_call.1} parent=5 // pred_check_branch
        %1784 = sbr.rel (%p1782) target = $region64
      $region63: #{tpu_custom_call.1} parent=5 // pred_region
        %s1785 = ssub.s32 %s18, 2
        // Predicated region
        $region65: #{tpu_custom_call.1} parent=63 // pred_check
          %p1786 = pneg %p199
        $region66: #{tpu_custom_call.1} parent=63 // pred_check_branch
          %1788 = sbr.rel (%p1786) target = $region68
        $region67: #{tpu_custom_call.1} parent=63 // pred_region
          %s1789 = sand.u32 %s184, 1
          %s1790 = scalar_lea.sflag [#allocation6], %s1789
          %s1791 = sand.u32 %s184, 1
          %s1792 = smul.addr %s1791, 16
          %s1793 = scalar_lea.vmem [#allocation9], %s1792
          %1794 = dma.done %s1790, 256
        $region68: #{tpu_custom_call.1} parent=63 // pred_fallthru
          _
      $region64: #{tpu_custom_call.1} parent=5 // pred_fallthru
        _
    $region6: #{tpu_custom_call.1} parent=1 // loop_footer
      %s22 = sadd.s32 1, %s18
    $region7: #{tpu_custom_call.1} parent=1 // loop_footer_branch
      %17 = sbr.rel target = $region3
    $region8: #{tpu_custom_call.1} parent=1 // loop_exit
      _
    %1795 = vsyncpa [#allocation5], 1
    %s1796 = scalar_lea.sflag [#allocation5], 1
    %1797 = vsyncpa %s1796, 1
    %1798 = vsyncpa [#allocation8], 1
    %1799 = vsyncpa [#allocation6], 1
    %s1800 = scalar_lea.sflag [#allocation6], 1
    %1801 = vsyncpa %s1800, 1

</llo_original>
